<compile_context>
chip_gen: v7x
topology: tpu7x:2x2x1
jax: 0.10.0
libtpu: 0.0.40
codegen_flags: <defaults>
</compile_context>

<pallas_src>
import functools

import jax
import jax.numpy as jnp
from jax.experimental import pallas as pl
from jax.experimental.pallas import tpu as pltpu


def _ru(x, m):
    return (x + m - 1) // m * m


def _device_kind():
    try:
        return jax.devices()[0].device_kind.lower()
    except Exception:
        return ""


_KIND = _device_kind()
# 256-wide block-diagonal grouped-conv chunks only pay off on 256x256 MXUs.
_GCONV_CHUNK = 256 if ("v6" in _KIND or "v7" in _KIND) else 128
# v5e/v6e have 128 MiB physical VMEM; v7x only 64 MiB (keep headroom there).
_VMEM_LIMIT = (96 * 1024 * 1024 if ("v5" in _KIND or "v6" in _KIND)
               else 48 * 1024 * 1024)


def _pick_tile(m, cap=512):
    """Row tile: prefer a divisor of the 8-aligned row count (no padding);
    if no decent divisor exists, pad rows up to a multiple of a fixed tile."""
    mp = _ru(m, 8)
    if mp <= cap:
        return mp, mp
    best = 8
    for t in range(8, cap + 8, 8):
        if mp % t == 0:
            best = t
    if best >= 64:
        return best, mp
    tm = min(cap, 256)
    return tm, _ru(mp, tm)


def _cp(sem):
    return pltpu.CompilerParams(dimension_semantics=sem,
                                vmem_limit_bytes=_VMEM_LIMIT)


# ----------------------------------------------------------------------------
# Matmul (single K tile) with optional fused BN(+ReLU) prologue on A and a
# BN batch-statistics epilogue (per-column sum / sum-of-squares).
# ----------------------------------------------------------------------------

def _make_mm_kernel(tm, true_m, needs_mask, has_prologue, a_relu, compute_stats):
    def kernel(*refs):
        it = iter(refs)
        a_ref = next(it)
        b_ref = next(it)
        if has_prologue:
            am_ref = next(it)
            ai_ref = next(it)
        o_ref = next(it)
        if compute_stats:
            s_ref = next(it)
            q_ref = next(it)
        if has_prologue:
            a_scr = next(it)

        # Grid indices are read at the kernel top level only (never inside a
        # pl.when body) -- required for interpret mode and cheaper anyway.
        i = pl.program_id(0)
        j = pl.program_id(1)

        if has_prologue:
            # BN(+ReLU) of the previous conv, computed once per row tile
            # (j == 0) and cached in VMEM for the remaining column tiles.
            @pl.when(j == 0)
            def _():
                a = (a_ref[...].astype(jnp.float32) - am_ref[...]) * ai_ref[...]
                if a_relu:
                    a = jnp.maximum(a, 0.0)
                a_scr[...] = a.astype(jnp.bfloat16)

            a = a_scr[...]
        else:
            a = a_ref[...]
            del j

        acc = jnp.dot(a, b_ref[...], preferred_element_type=jnp.float32)
        o_ref[...] = acc.astype(o_ref.dtype)

        if compute_stats:
            if needs_mask:
                # Padded rows become nonzero after the BN prologue; mask them
                # out of the statistics (main body, not inside pl.when).
                rows = (jax.lax.broadcasted_iota(jnp.int32, acc.shape, 0)
                        + i * tm)
                acc = jnp.where(rows < true_m, acc, 0.0)
            s_ref[...] = jnp.sum(acc, axis=0, keepdims=True)[None]
            q_ref[...] = jnp.sum(acc * acc, axis=0, keepdims=True)[None]

    return kernel


def matmul(a, b, *, a_mean=None, a_inv=None, a_relu=False,
           compute_stats=False, out_dtype=jnp.bfloat16):
    """(M, K) @ (K, N) on the MXU, bf16 operands, f32 accumulation.
    K is streamed as a single tile (K <= 2048 for every matmul in this net)."""
    M, K = a.shape
    Kb, N = b.shape
    assert Kb == K and K <= 2048
    tm, Mp = _pick_tile(M)
    tn = N if N <= 512 else 512
    assert N % tn == 0

    a_p = a if a.dtype == jnp.bfloat16 else a.astype(jnp.bfloat16)
    if Mp != M:
        a_p = jnp.pad(a_p, ((0, Mp - M), (0, 0)))
    b_p = b if b.dtype == jnp.bfloat16 else b.astype(jnp.bfloat16)

    has_prologue = a_mean is not None
    inputs = [a_p, b_p]
    in_specs = [pl.BlockSpec((tm, K), lambda i, j: (i, 0)),
                pl.BlockSpec((K, tn), lambda i, j: (0, j))]
    if has_prologue:
        am = a_mean.reshape(1, K).astype(jnp.float32)
        ai = a_inv.reshape(1, K).astype(jnp.float32)
        inputs += [am, ai]
        in_specs += [pl.BlockSpec((1, K), lambda i, j: (0, 0)),
                     pl.BlockSpec((1, K), lambda i, j: (0, 0))]

    grid = (Mp // tm, N // tn)
    needs_mask = has_prologue and (Mp != M)
    kernel = _make_mm_kernel(tm, M, needs_mask, has_prologue, a_relu,
                             compute_stats)
    scratch = [pltpu.VMEM((tm, K), jnp.bfloat16)] if has_prologue else []
    # With the cached prologue, j must stay on one core (scratch reuse), so
    # mark it "arbitrary"; without a prologue both axes are independent.
    cparams = _cp(("parallel", "arbitrary") if has_prologue
                  else ("parallel", "parallel"))

    if compute_stats:
        out_shape = (jax.ShapeDtypeStruct((Mp, N), out_dtype),
                     jax.ShapeDtypeStruct((Mp // tm, 1, N), jnp.float32),
                     jax.ShapeDtypeStruct((Mp // tm, 1, N), jnp.float32))
        out_specs = (pl.BlockSpec((tm, tn), lambda i, j: (i, j)),
                     pl.BlockSpec((1, 1, tn), lambda i, j: (i, 0, j)),
                     pl.BlockSpec((1, 1, tn), lambda i, j: (i, 0, j)))
        out, ps, pq = pl.pallas_call(
            kernel, out_shape=out_shape, grid=grid, in_specs=in_specs,
            out_specs=out_specs, scratch_shapes=scratch,
            compiler_params=cparams)(*inputs)
        if Mp != M:
            out = out[:M]
        return out, jnp.sum(ps, axis=(0, 1)), jnp.sum(pq, axis=(0, 1))

    out = pl.pallas_call(
        kernel, out_shape=jax.ShapeDtypeStruct((Mp, N), out_dtype), grid=grid,
        in_specs=in_specs,
        out_specs=pl.BlockSpec((tm, tn), lambda i, j: (i, j)),
        scratch_shapes=scratch, compiler_params=cparams)(*inputs)
    if Mp != M:
        out = out[:M]
    return out


# ----------------------------------------------------------------------------
# Grouped 3x3 conv: K-packed block-diagonal chunk matmul.
# Per (row-tile, chunk) grid step: one (tm, 9*chunk) @ (9*chunk, chunk) dot.
# ----------------------------------------------------------------------------

def _gconv_kernel(a_ref, w_ref, o_ref, s_ref, q_ref):
    acc = jnp.dot(a_ref[0], w_ref[0], preferred_element_type=jnp.float32)
    o_ref[...] = acc.astype(o_ref.dtype)
    # BN batch-statistics epilogue (padded rows are zero, no masking needed).
    s_ref[...] = jnp.sum(acc, axis=0, keepdims=True)[None]
    q_ref[...] = jnp.sum(acc * acc, axis=0, keepdims=True)[None]


def grouped_conv3x3(x, w_chunks, stride):
    """Grouped 3x3 conv (padding=1).  x: (N,H,W,Cin) bf16 (already activated),
    w_chunks: (n_chunks, 9*chunk, chunk) bf16, block-diagonal inside each
    lane-dense output chunk, row order = [tap, in-channel-within-chunk].
    Returns flat output (M, Cout) bf16 plus per-channel sum / sum-sq and the
    output spatial size."""
    N, H, W, Cin = x.shape
    n_chunks, K9, chunk = w_chunks.shape
    Cout = n_chunks * chunk
    assert Cin == Cout and K9 == 9 * chunk   # Cin_g == Cout_g in this net
    Ho = (H + 2 - 3) // stride + 1
    Wo = (W + 2 - 3) // stride + 1
    M = N * Ho * Wo

    xp = jnp.pad(x, ((0, 0), (1, 1), (1, 1), (0, 0)))
    # TODO(synk): implicit-GEMM (halo'd BlockSpec / manual DMA) would avoid
    # materializing this 9x-inflated, K-packed patch tensor in HBM.
    taps = [xp[:, i:i + stride * Ho:stride, j:j + stride * Wo:stride, :]
            .reshape(M, Cin) for i in range(3) for j in range(3)]
    pat = jnp.stack(taps, axis=1)                       # (M, 9, Cin)
    pat = pat.reshape(M, 9, n_chunks, chunk)
    pat = jnp.transpose(pat, (2, 0, 1, 3)).reshape(n_chunks, M, 9 * chunk)

    tm, Mp = _pick_tile(M, cap=256)
    if Mp != M:
        pat = jnp.pad(pat, ((0, 0), (0, Mp - M), (0, 0)))

    out, ps, pq = pl.pallas_call(
        _gconv_kernel,
        out_shape=(jax.ShapeDtypeStruct((Mp, Cout), jnp.bfloat16),
                   jax.ShapeDtypeStruct((Mp // tm, 1, Cout), jnp.float32),
                   jax.ShapeDtypeStruct((Mp // tm, 1, Cout), jnp.float32)),
        grid=(n_chunks, Mp // tm),
        in_specs=[pl.BlockSpec((1, tm, 9 * chunk), lambda q, i: (q, i, 0)),
                  pl.BlockSpec((1, 9 * chunk, chunk), lambda q, i: (q, 0, 0))],
        out_specs=(pl.BlockSpec((tm, chunk), lambda q, i: (i, q)),
                   pl.BlockSpec((1, 1, chunk), lambda q, i: (i, 0, q)),
                   pl.BlockSpec((1, 1, chunk), lambda q, i: (i, 0, q))),
        compiler_params=_cp(("parallel", "parallel")),
    )(pat, w_chunks)
    if Mp != M:
        out = out[:M]
    return out, jnp.sum(ps, axis=(0, 1)), jnp.sum(pq, axis=(0, 1)), Ho, Wo


# ----------------------------------------------------------------------------
# BatchNorm helpers (train-mode batch statistics, gamma=1, beta=0)
# ----------------------------------------------------------------------------

def bn_stats(col_sum, col_sumsq, count, eps=1e-5):
    mean = col_sum / count
    var = jnp.maximum(col_sumsq / count - mean * mean, 0.0)
    return mean, jax.lax.rsqrt(var + eps)


def _bn_apply_kernel(x_ref, m_ref, i_ref, o_ref, *, relu):
    y = (x_ref[...].astype(jnp.float32) - m_ref[...]) * i_ref[...]
    if relu:
        y = jnp.maximum(y, 0.0)
    o_ref[...] = y.astype(o_ref.dtype)


def bn_apply(x, mean, inv, relu):
    """Standalone BN apply (+ReLU) on flat (M, C); used only where the
    consumer cannot absorb it (the spatially padded grouped-conv input).
    TODO(synk): fold into an implicit-GEMM grouped-conv prologue."""
    M, C = x.shape
    tm, Mp = _pick_tile(M)
    xp = x if Mp == M else jnp.pad(x, ((0, Mp - M), (0, 0)))
    out = pl.pallas_call(
        functools.partial(_bn_apply_kernel, relu=relu),
        out_shape=jax.ShapeDtypeStruct((Mp, C), jnp.bfloat16),
        grid=(Mp // tm,),
        in_specs=[pl.BlockSpec((tm, C), lambda i: (i, 0)),
                  pl.BlockSpec((1, C), lambda i: (0, 0)),
                  pl.BlockSpec((1, C), lambda i: (0, 0))],
        out_specs=pl.BlockSpec((tm, C), lambda i: (i, 0)),
        compiler_params=_cp(("parallel",)),
    )(xp, mean.reshape(1, C), inv.reshape(1, C))
    return out if Mp == M else out[:M]


# ----------------------------------------------------------------------------
# MaxPool 3x3 / stride 2 / pad 1 fused with the stem BatchNorm + ReLU
# ----------------------------------------------------------------------------

def _maxpool_bn_kernel(ee_ref, eo_ref, oe_ref, oo_ref, m_ref, i_ref, o_ref,
                       *, Ho, Wo):
    ee = ee_ref[...]
    eo = eo_ref[...]
    oe = oe_ref[...]
    oo = oo_ref[...]
    m = oo
    m = jnp.maximum(m, ee[:, :Ho, :Wo, :])
    m = jnp.maximum(m, ee[:, :Ho, 1:, :])
    m = jnp.maximum(m, ee[:, 1:, :Wo, :])
    m = jnp.maximum(m, ee[:, 1:, 1:, :])
    m = jnp.maximum(m, eo[:, :Ho, :, :])
    m = jnp.maximum(m, eo[:, 1:, :, :])
    m = jnp.maximum(m, oe[:, :, :Wo, :])
    m = jnp.maximum(m, oe[:, :, 1:, :])
    mean = m_ref[...].reshape(1, 1, 1, -1)
    inv = i_ref[...].reshape(1, 1, 1, -1)
    y = (m.astype(jnp.float32) - mean) * inv
    o_ref[...] = jnp.maximum(y, 0.0).astype(o_ref.dtype)


def maxpool3x3s2_bn_relu(x, mean, inv):
    """Max pool on the raw stem conv output; BN+ReLU applied to the pooled
    values (exact: a positive-scale per-channel affine + ReLU commutes with
    max), so BN runs on the 4x smaller tensor."""
    N, H, W, C = x.shape
    Ho = (H + 2 - 3) // 2 + 1
    Wo = (W + 2 - 3) // 2 + 1
    neg = jnp.finfo(jnp.bfloat16).min
    # TODO(synk): the parity split could be done in-kernel with strided pl.ds
    # reads to avoid these 4 XLA strided-slice copies of the stem activation.
    xp = jnp.pad(x, ((0, 0), (1, 1), (1, 1), (0, 0)), constant_values=neg)
    ee = xp[:, 0::2, 0::2, :][:, :Ho + 1, :Wo + 1, :]
    eo = xp[:, 0::2, 1::2, :][:, :Ho + 1, :Wo, :]
    oe = xp[:, 1::2, 0::2, :][:, :Ho, :Wo + 1, :]
    oo = xp[:, 1::2, 1::2, :][:, :Ho, :Wo, :]
    return pl.pallas_call(
        functools.partial(_maxpool_bn_kernel, Ho=Ho, Wo=Wo),
        out_shape=jax.ShapeDtypeStruct((N, Ho, Wo, C), jnp.bfloat16),
        grid=(N,),
        in_specs=[pl.BlockSpec((1, Ho + 1, Wo + 1, C), lambda n: (n, 0, 0, 0)),
                  pl.BlockSpec((1, Ho + 1, Wo, C), lambda n: (n, 0, 0, 0)),
                  pl.BlockSpec((1, Ho, Wo + 1, C), lambda n: (n, 0, 0, 0)),
                  pl.BlockSpec((1, Ho, Wo, C), lambda n: (n, 0, 0, 0)),
                  pl.BlockSpec((1, C), lambda n: (0, 0)),
                  pl.BlockSpec((1, C), lambda n: (0, 0))],
        out_specs=pl.BlockSpec((1, Ho, Wo, C), lambda n: (n, 0, 0, 0)),
        compiler_params=_cp(("parallel",)),
    )(ee, eo, oe, oo, mean.reshape(1, C), inv.reshape(1, C))


# ----------------------------------------------------------------------------
# Global average pool, SE MLP, and SE-scale + residual + ReLU (BN fused)
# ----------------------------------------------------------------------------

def _gap_kernel(x_ref, o_ref, *, inv_count):
    o_ref[...] = (jnp.sum(x_ref[...].astype(jnp.float32), axis=1,
                          keepdims=True) * inv_count)


def global_avgpool(x):
    """(N, HW, C) -> (N, C) mean over HW (f32 output); one step per image.
    TODO(synk): could be emitted from the conv3 matmul epilogue to save one
    re-read of y3."""
    N, HW, C = x.shape
    HWp = _ru(HW, 8)
    xp = x if HWp == HW else jnp.pad(x, ((0, 0), (0, HWp - HW), (0, 0)))
    out = pl.pallas_call(
        functools.partial(_gap_kernel, inv_count=1.0 / HW),
        out_shape=jax.ShapeDtypeStruct((N, 1, C), jnp.float32),
        grid=(N,),
        in_specs=[pl.BlockSpec((1, HWp, C), lambda n: (n, 0, 0))],
        out_specs=pl.BlockSpec((1, 1, C), lambda n: (n, 0, 0)),
        compiler_params=_cp(("parallel",)),
    )(xp)
    return out[:, 0, :]


def _se_kernel(x_ref, w1_ref, b1_ref, w2_ref, b2_ref, o_ref):
    h = jnp.dot(x_ref[...].astype(jnp.bfloat16), w1_ref[...],
                preferred_element_type=jnp.float32) + b1_ref[...]
    h = jnp.maximum(h, 0.0)
    y = jnp.dot(h.astype(jnp.bfloat16), w2_ref[...],
                preferred_element_type=jnp.float32) + b2_ref[...]
    o_ref[...] = jax.nn.sigmoid(y)


def se_mlp(x, w1, b1, w2, b2):
    """sigmoid(relu(x @ w1 + b1) @ w2 + b2).  x: (N, C) f32 (tiny op)."""
    N, C = x.shape
    Np = _ru(N, 8)
    xp = jnp.pad(x, ((0, Np - N), (0, 0)))
    out = pl.pallas_call(
        _se_kernel, out_shape=jax.ShapeDtypeStruct((Np, C), jnp.float32),
    )(xp, w1, b1, w2, b2)
    return out[:N]


def _se_res_kernel(y_ref, se_ref, r_ref, m3_ref, i3_ref, mr_ref, ir_ref, o_ref):
    y = (y_ref[...].astype(jnp.float32) - m3_ref[...]) * i3_ref[...]
    r = (r_ref[...].astype(jnp.float32) - mr_ref[...]) * ir_ref[...]
    o_ref[...] = jnp.maximum(y * se_ref[...] + r, 0.0).astype(o_ref.dtype)


def se_residual_relu(y, stats3, se, r, stats_r):
    """relu( BN3(y) * se + BN_r(r) ).  BN applies fused here; identity stats
    (mean 0, inv 1) for a plain residual."""
    N, HW, C = y.shape
    thw, HWp = _pick_tile(HW)
    pad = (lambda t: t) if HWp == HW else (
        lambda t: jnp.pad(t, ((0, 0), (0, HWp - HW), (0, 0))))
    m3, i3 = stats3
    mr, ir = stats_r
    out = pl.pallas_call(
        _se_res_kernel,
        out_shape=jax.ShapeDtypeStruct((N, HWp, C), jnp.bfloat16),
        grid=(N, HWp // thw),
        in_specs=[pl.BlockSpec((1, thw, C), lambda n, i: (n, i, 0)),
                  pl.BlockSpec((1, 1, C), lambda n, i: (n, 0, 0)),
                  pl.BlockSpec((1, thw, C), lambda n, i: (n, i, 0)),
                  pl.BlockSpec((1, 1, C), lambda n, i: (0, 0, 0)),
                  pl.BlockSpec((1, 1, C), lambda n, i: (0, 0, 0)),
                  pl.BlockSpec((1, 1, C), lambda n, i: (0, 0, 0)),
                  pl.BlockSpec((1, 1, C), lambda n, i: (0, 0, 0))],
        out_specs=pl.BlockSpec((1, thw, C), lambda n, i: (n, i, 0)),
        compiler_params=_cp(("parallel", "parallel")),
    )(pad(y), se.reshape(N, 1, C), pad(r),
      m3.reshape(1, 1, C), i3.reshape(1, 1, C),
      mr.reshape(1, 1, C), ir.reshape(1, 1, C))
    return out if HWp == HW else out[:, :HW]


# ----------------------------------------------------------------------------
# Stem im2col (XLA glue)
# ----------------------------------------------------------------------------

def _im2col_flat(x, k, stride, pad):
    # TODO(synk): implicit-GEMM with halo BlockSpecs would avoid materializing
    # the ~12x inflated stem patch matrix in HBM.
    N, H, W, C = x.shape
    xp = jnp.pad(x, ((0, 0), (pad, pad), (pad, pad), (0, 0)))
    Ho = (H + 2 * pad - k) // stride + 1
    Wo = (W + 2 * pad - k) // stride + 1
    cols = [xp[:, i:i + stride * Ho:stride, j:j + stride * Wo:stride, :]
            for i in range(k) for j in range(k)]
    return jnp.concatenate(cols, axis=-1).reshape(N * Ho * Wo, k * k * C), Ho, Wo


# ----------------------------------------------------------------------------
# Parameters (matmul-ready packing done once, at init)
# ----------------------------------------------------------------------------

def _pack_grouped(w, groups, chunk):
    """(Cout, Cin_g, 3, 3) grouped weight -> (n_chunks, 9*chunk, chunk) bf16,
    block-diagonal within each lane-dense `chunk`-wide output slab; K rows are
    ordered [tap, in-channel-within-chunk] to match the K-packed patches."""
    Cout, Cin_g, kh, kw = w.shape
    Cout_g = Cout // groups
    GC = chunk // Cout_g
    n_chunks = Cout // chunk
    assert GC * Cout_g == chunk and n_chunks * GC == groups
    wg = w.reshape(groups, Cout_g, Cin_g, kh, kw)
    wg = jnp.transpose(wg, (0, 3, 4, 2, 1))          # (G, kh, kw, Cin_g, Cout_g)
    wg = wg.reshape(n_chunks, GC, kh * kw, Cin_g, Cout_g)
    eye = jnp.eye(GC, dtype=w.dtype)
    wbd = jnp.einsum('qgtcd,gh->qtgchd', wg, eye)    # block-diag within chunk
    wbd = wbd.reshape(n_chunks, kh * kw, GC * Cin_g, GC * Cout_g)
    return wbd.reshape(n_chunks, kh * kw * chunk, chunk).astype(jnp.bfloat16)


def init_params(key, blocks, cardinality, bottleneck_width, num_classes,
                expansion=2):
    # The module hard-codes layer in_places 64/256/512/1024 and Linear(2048,.),
    # which requires cardinality * bottleneck_width == 128.
    assert cardinality * bottleneck_width == 128
    keys = iter(jax.random.split(key, 256))

    def conv_w(cout, cin, kh, kw):
        std = (2.0 / (cout * kh * kw)) ** 0.5        # kaiming fan_out
        return jax.random.normal(next(keys), (cout, cin, kh, kw), jnp.float32) * std

    params = {'num_classes': num_classes}
    ws = conv_w(64, 3, 7, 7)
    params['stem_w'] = jnp.transpose(ws, (2, 3, 1, 0)).reshape(147, 64).astype(jnp.bfloat16)

    bw = bottleneck_width
    in_places = 64
    layers = []
    for li, nblocks in enumerate(blocks):
        places = cardinality * bw
        layer_stride = 1 if li == 0 else 2
        chunk = min(_GCONV_CHUNK, places)
        layer = []
        for bi in range(nblocks):
            stride = layer_stride if bi == 0 else 1
            downsampling = (bi == 0)
            cin = in_places if bi == 0 else places * expansion
            cout = places * expansion
            hid = cout // 16
            w1 = conv_w(places, cin, 1, 1)
            w2 = conv_w(places, places // cardinality, 3, 3)
            w3 = conv_w(cout, places, 1, 1)
            p = {
                'stride': stride,
                'downsampling': downsampling,
                'w1': jnp.transpose(w1[:, :, 0, 0], (1, 0)).astype(jnp.bfloat16),
                'w2c': _pack_grouped(w2, cardinality, chunk),
                'w3': jnp.transpose(w3[:, :, 0, 0], (1, 0)).astype(jnp.bfloat16),
                'se_w1': (jax.random.normal(next(keys), (cout, hid), jnp.float32)
                          * (2.0 / hid) ** 0.5).astype(jnp.bfloat16),
                'se_b1': jax.random.uniform(next(keys), (1, hid), jnp.float32,
                                            -1.0, 1.0) / (cout ** 0.5),
                'se_w2': (jax.random.normal(next(keys), (hid, cout), jnp.float32)
                          * (2.0 / cout) ** 0.5).astype(jnp.bfloat16),
                'se_b2': jax.random.uniform(next(keys), (1, cout), jnp.float32,
                                            -1.0, 1.0) / (hid ** 0.5),
            }
            if downsampling:
                wd = conv_w(cout, cin, 1, 1)
                p['wd'] = jnp.transpose(wd[:, :, 0, 0], (1, 0)).astype(jnp.bfloat16)
            layer.append(p)
        layers.append(layer)
        in_places = places * expansion
        bw *= expansion
    params['layers'] = layers

    assert in_places == 2048
    bound = 1.0 / (2048 ** 0.5)
    fc_w = jax.random.uniform(next(keys), (2048, num_classes), jnp.float32,
                              -bound, bound)
    params['fc_w'] = jnp.pad(
        fc_w, ((0, 0), (0, _ru(num_classes, 128) - num_classes))
    ).astype(jnp.bfloat16)                            # lane-dense FC weight
    params['fc_b'] = jax.random.uniform(next(keys), (num_classes,), jnp.float32,
                                        -bound, bound)
    return params


# ----------------------------------------------------------------------------
# Forward pass
# ----------------------------------------------------------------------------

def bottleneck_block(x, p):
    N, H, W, Cin = x.shape
    places = p['w1'].shape[1]
    cout = p['w3'].shape[1]
    s = p['stride']

    # 1x1 conv; BN1 batch statistics come out of the matmul epilogue.
    M1 = N * H * W
    y1, s1, q1 = matmul(x.reshape(M1, Cin), p['w1'], compute_stats=True)
    m1, i1 = bn_stats(s1, q1, M1)
    a1 = bn_apply(y1, m1, i1, relu=True).reshape(N, H, W, places)

    # Grouped 3x3 conv as a K-packed block-diagonal chunk matmul; BN2 stats fused.
    y2, s2, q2, Ho, Wo = grouped_conv3x3(a1, p['w2c'], s)
    M2 = N * Ho * Wo
    m2, i2 = bn_stats(s2, q2, M2)

    # 1x1 conv with BN2+ReLU fused (and cached) in the A prologue; BN3 stats fused.
    y3, s3, q3 = matmul(y2, p['w3'], a_mean=m2, a_inv=i2, a_relu=True,
                        compute_stats=True)
    m3, i3 = bn_stats(s3, q3, M2)
    y3 = y3.reshape(N, Ho * Wo, cout)

    # SE: pool the raw conv3 output, apply BN3 to the pooled vector (exact,
    # since the affine commutes with the mean), then the 2-layer MLP.
    gap = global_avgpool(y3)
    gap = (gap - m3[None, :]) * i3[None, :]
    se = se_mlp(gap, p['se_w1'], p['se_b1'], p['se_w2'], p['se_b2'])

    if p['downsampling']:
        xr = x[:, ::s, ::s, :] if s > 1 else x
        r, sd, qd = matmul(xr.reshape(M2, Cin), p['wd'], compute_stats=True)
        md, idn = bn_stats(sd, qd, M2)
        r = r.reshape(N, Ho * Wo, cout)
        stats_r = (md, idn)
    else:
        r = x.reshape(N, H * W, Cin)
        stats_r = (jnp.zeros((cout,), jnp.float32),
                   jnp.ones((cout,), jnp.float32))

    out = se_residual_relu(y3, (m3, i3), se, r, stats_r)
    return out.reshape(N, Ho, Wo, cout)


def seresnext_forward(params, x_nchw):
    x = jnp.transpose(x_nchw, (0, 2, 3, 1)).astype(jnp.bfloat16)   # NCHW -> NHWC
    N = x.shape[0]

    # Stem: 7x7/2 conv (im2col matmul with BN-stats epilogue), then BN+ReLU
    # folded into the 3x3/2 max-pool kernel.
    patches, Ho, Wo = _im2col_flat(x, 7, 2, 3)
    Ms = patches.shape[0]
    ys, ss, qs = matmul(patches, params['stem_w'], compute_stats=True)
    ms, isd = bn_stats(ss, qs, Ms)
    x = maxpool3x3s2_bn_relu(ys.reshape(N, Ho, Wo, 64), ms, isd)

    for layer in params['layers']:
        for p in layer:
            x = bottleneck_block(x, p)

    Nf, Hf, Wf, C = x.shape
    assert Hf == 7 and Wf == 7 and C == 2048   # required by AvgPool2d(7)+Linear
    # AvgPool2d(7, stride=1) on a 7x7 map == global mean; then FC.
    pooled = global_avgpool(x.reshape(Nf, Hf * Wf, C))              # (N, 2048)
    logits = matmul(pooled, params['fc_w'], out_dtype=jnp.float32)  # lane-dense
    nc = params['num_classes']
    return logits[:, :nc] + params['fc_b'][None, :]


if __name__ == "__main__":
    key = jax.random.PRNGKey(0)
    k_param, k_in = jax.random.split(key)

    blocks = (1, 1, 1, 1)                   # depth is a constructor arg; keep small
    cardinality, bottleneck_width = 32, 4   # forced by hard-coded widths in module
    num_classes = 10

    params = init_params(k_param, blocks, cardinality, bottleneck_width, num_classes)

    # Spatial size 224 is implied by AvgPool2d(7) + Linear(2048, num_classes).
    x = jax.random.normal(k_in, (2, 3, 224, 224), jnp.float32)

    out = seresnext_forward(params, x)
    out = jax.block_until_ready(out)
    assert out.shape == (2, num_classes)
    assert bool(jnp.all(jnp.isfinite(out)))
    print("KERNEL_OK")
</pallas_src>

<mosaic_0001>
module attributes {stable_mosaic.version = 11 : i64} {
  func.func @kernel(%arg0: i32, %arg1: i32, %arg2: memref<512x147xbf16, #tpu.memory_space<vmem>>, %arg3: memref<147x64xbf16, #tpu.memory_space<vmem>>, %arg4: memref<512x64xbf16, #tpu.memory_space<vmem>>, %arg5: memref<1x1x64xf32, #tpu.memory_space<vmem>>, %arg6: memref<1x1x64xf32, #tpu.memory_space<vmem>>) attributes {dimension_semantics = [#tpu.dimension_semantics<parallel>, #tpu.dimension_semantics<parallel>], iteration_bounds = array<i64: 49, 1>, scalar_prefetch = 0 : i64, scratch_operands = 0 : i64, tpu.core_type = #tpu.core_type<tc>, window_params = [{transform_indices = @transform_0, window_bounds = array<i64: 512, 147>}, {transform_indices = @transform_1, window_bounds = array<i64: 147, 64>}, {transform_indices = @transform_2, window_bounds = array<i64: 512, 64>}, {transform_indices = @transform_3, window_bounds = array<i64: 1, 1, 64>}, {transform_indices = @transform_4, window_bounds = array<i64: 1, 1, 64>}]} {
    %c0 = arith.constant 0 : index
    %c0_0 = arith.constant 0 : index
    %0 = vector.load %arg2[%c0, %c0_0] : memref<512x147xbf16, #tpu.memory_space<vmem>>, vector<512x147xbf16>
    %c0_1 = arith.constant 0 : index
    %c0_2 = arith.constant 0 : index
    %1 = vector.load %arg3[%c0_1, %c0_2] : memref<147x64xbf16, #tpu.memory_space<vmem>>, vector<147x64xbf16>
    %cst = arith.constant dense<0.000000e+00> : vector<512x64xf32>
    %2 = tpu.matmul %0, %1, %cst {dimension_numbers = #tpu.dot_dimension_numbers<[1], [0], [0], [1], [0, 0, 1, 1], [], []>} : vector<512x147xbf16>, vector<147x64xbf16>, vector<512x64xf32> -> vector<512x64xf32>
    %3 = arith.truncf %2 : vector<512x64xf32> to vector<512x64xbf16>
    %c0_3 = arith.constant 0 : index
    %c0_4 = arith.constant 0 : index
    %4 = vector.load %arg4[%c0_3, %c0_4] : memref<512x64xbf16, #tpu.memory_space<vmem>>, vector<512x64xbf16>
    tpu.vector_store %arg4[%c0_3, %c0_4], %3 {strides = array<i32>} : memref<512x64xbf16, #tpu.memory_space<vmem>>, vector<512x64xbf16>,
    %cst_5 = arith.constant dense<0.000000e+00> : vector<64xf32>
    %5 = vector.multi_reduction <add>, %2, %cst_5 [0] : vector<512x64xf32> to vector<64xf32>
    %6 = vector.shape_cast %5 : vector<64xf32> to vector<1x64xf32>
    %7 = vector.shape_cast %6 : vector<1x64xf32> to vector<1x1x64xf32>
    %c0_6 = arith.constant 0 : index
    %c0_7 = arith.constant 0 : index
    %c0_8 = arith.constant 0 : index
    %8 = vector.load %arg5[%c0_6, %c0_7, %c0_8] : memref<1x1x64xf32, #tpu.memory_space<vmem>>, vector<1x1x64xf32>
    tpu.vector_store %arg5[%c0_6, %c0_7, %c0_8], %7 {strides = array<i32>} : memref<1x1x64xf32, #tpu.memory_space<vmem>>, vector<1x1x64xf32>,
    %9 = arith.mulf %2, %2 : vector<512x64xf32>
    %cst_9 = arith.constant dense<0.000000e+00> : vector<64xf32>
    %10 = vector.multi_reduction <add>, %9, %cst_9 [0] : vector<512x64xf32> to vector<64xf32>
    %11 = vector.shape_cast %10 : vector<64xf32> to vector<1x64xf32>
    %12 = vector.shape_cast %11 : vector<1x64xf32> to vector<1x1x64xf32>
    %c0_10 = arith.constant 0 : index
    %c0_11 = arith.constant 0 : index
    %c0_12 = arith.constant 0 : index
    %13 = vector.load %arg6[%c0_10, %c0_11, %c0_12] : memref<1x1x64xf32, #tpu.memory_space<vmem>>, vector<1x1x64xf32>
    tpu.vector_store %arg6[%c0_10, %c0_11, %c0_12], %12 {strides = array<i32>} : memref<1x1x64xf32, #tpu.memory_space<vmem>>, vector<1x1x64xf32>,
    return
  }
  func.func @transform_0(%arg0: i32, %arg1: i32) -> (i32, i32) {
    %c0_i32 = arith.constant 0 : i32
    %c0_i32_0 = arith.constant 0 : i32
    return %arg0, %c0_i32 : i32, i32
  }
  func.func @transform_1(%arg0: i32, %arg1: i32) -> (i32, i32) {
    %c0_i32 = arith.constant 0 : i32
    %c0_i32_0 = arith.constant 0 : i32
    return %c0_i32, %arg1 : i32, i32
  }
  func.func @transform_2(%arg0: i32, %arg1: i32) -> (i32, i32) {
    %c0_i32 = arith.constant 0 : i32
    return %arg0, %arg1 : i32, i32
  }
  func.func @transform_3(%arg0: i32, %arg1: i32) -> (i32, i32, i32) {
    %c0_i32 = arith.constant 0 : i32
    %c0_i32_0 = arith.constant 0 : i32
    return %arg0, %c0_i32, %arg1 : i32, i32, i32
  }
  func.func @transform_4(%arg0: i32, %arg1: i32) -> (i32, i32, i32) {
    %c0_i32 = arith.constant 0 : i32
    %c0_i32_0 = arith.constant 0 : i32
    return %arg0, %c0_i32, %arg1 : i32, i32, i32
  }
}

</mosaic_0001>

<llo_original>
// kernel: tpu_custom_call.1
$region0: #{tpu_custom_call.1}
  #allocation0 [shape = 'u32[]', space=smem, size = 0x4, offset = 0x4, fixed_abs, tag = 'smem constant byte address 0x4 - core index']
  #allocation1 [shape = 'u32[144,128]{1,0:T(1,128)}', space=vmem, size = 0x12000, scoped, tag = 'internal scratch']
  %s0 = inlined_call_operand.vmem [shape: bf16[25088,147], index: 0, kind: input, shape index: {}]
  %s1 = inlined_call_operand.vmem [shape: bf16[147,64], index: 1, kind: input, shape index: {}]
  %s2 = inlined_call_operand.hbm [shape: bf16[25088,64], index: 2, kind: output, shape index: {0}]
  %s3 = inlined_call_operand.hbm [shape: f32[49,1,64], index: 3, kind: output, shape index: {1}]
  %s4 = inlined_call_operand.hbm [shape: f32[49,1,64], index: 4, kind: output, shape index: {2}]
  %5 = xla_tuple %s2, %s3, %s4
  %s6 = sld [smem:[#allocation0]]
  $region57: #{tpu_custom_call.1} parent=0
    _
  %s8 = ssub.s32 1, %s6
  %s9 = scalar_select 0, %s8, %s6
  $region1: #{tpu_custom_call.1} parent=0
    #allocation2 [shape = 'u8[262144]{0}', space=vmem, size = 0x40000, scoped, tag = 'output window, operand 0']
    #allocation3 [shape = 's32[2]{0}', space=sflag, size = 0x8, scoped, tag = 'scoped memory for tpu_custom_call.1']
    #allocation4 [shape = 'u8[1024]{0}', space=vmem, size = 0x400, scoped, tag = 'output window, operand 1']
    #allocation5 [shape = 's32[2]{0}', space=sflag, size = 0x8, scoped, tag = 'scoped memory for tpu_custom_call.1']
    #allocation6 [shape = 'u8[1024]{0}', space=vmem, size = 0x400, scoped, tag = 'output window, operand 2']
    %10 = vsyncpa [#allocation3], 0
    %s11 = scalar_lea.sflag [#allocation3], 1
    %12 = vsyncpa %s11, 0
    %13 = vsyncpa [#allocation5], 0
    %s14 = scalar_lea.sflag [#allocation5], 1
    %15 = vsyncpa %s14, 0
    loop: start=0, step=1, limit=51
    $region2: #{tpu_custom_call.1} parent=1 // loop_pre_header
      _
    $region3: #{tpu_custom_call.1} parent=1 // loop_header
      %s17 = sphi 0, %s21
      %p18 = scmp.ge.s32.totalorder %s17, 51
      %s24 = sphi 0, %s36
      %s25 = sphi 0, %s32
      %s26 = sphi 0, %s24
      %s27 = sphi 0, %s25
      %s28 = sphi 0, %s26
      %s29 = sphi 0, %s27
      %s39 = sphi 0, %s41
      %s42 = sphi 0, %s39
      %s43 = sphi 0, %s42
      %s59 = sphi 0, %s43
      %s65 = sphi 0, %s67
      %s68 = sphi 0, %s65
      %s69 = sphi 0, %s68
      %s85 = sphi 0, %s69
      %s93 = sphi 0, %s95
      %s96 = sphi 0, %s93
      %s97 = sphi 0, %s96
      %s113 = sphi 0, %s97
      %s121 = sphi 0, %s123
      %s124 = sphi 0, %s121
      %s125 = sphi 0, %s124
      %s141 = sphi 0, %s125
      %s149 = sphi 0, %s151
      %s152 = sphi 0, %s149
      %s153 = sphi 0, %s152
      %s169 = sphi 0, %s153
    $region4: #{tpu_custom_call.1} parent=1 // loop_header_branch
      %20 = sbr.rel (%p18) target = $region8
    $region5: #{tpu_custom_call.1} parent=1 // loop_body
      %s22 = ssub.s32 %s17, 1
      %s23 = ssub.s32 %s17, 2
      %s30 = sadd.s32 1, %s25
      %p31 = scmp.ge.s32.totalorder %s30, 1
      %s32 = scalar_select %p31, 0, %s30
      %s33 = sadd.s32 1, %s24
      %s34 = scalar_select %p31, %s33, %s24
      %p35 = scmp.ge.s32.totalorder %s34, 49
      %s36 = scalar_select %p35, 0, %s34
      %s37 = ssub.s32 %s24, %s36
      %p38 = scmp.eq.s32.totalorder %s37, 0
      %s40 = sadd.s32 %s39, 1
      %s41 = scalar_select %p38, %s39, %s40
      %p44 = pneg %p38
      %p45 = scmp.eq.s32.totalorder %s17, 48
      %p46 = por %p44, %p45
      %p47 = scmp.ne.s32.totalorder %s39, %s42
      %p48 = scmp.eq.s32.totalorder %s17, 0
      %p49 = por %p47, %p48
      %p50 = scmp.ne.s32.totalorder %s39, %s42
      %p51 = scmp.eq.s32.totalorder %s22, 48
      %p52 = por %p50, %p51
      %p53 = scmp.ne.s32.totalorder %s42, %s43
      %p54 = scmp.eq.s32.totalorder %s22, 0
      %p55 = por %p53, %p54
      %p56 = scmp.ne.s32.totalorder %s42, %s43
      %p57 = scmp.eq.s32.totalorder %s23, 48
      %p58 = por %p56, %p57
      %p60 = scmp.ne.s32.totalorder %s43, %s59
      %p61 = scmp.eq.s32.totalorder %s23, 0
      %p62 = por %p60, %p61
      %s63 = ssub.s32 %s25, %s32
      %p64 = scmp.eq.s32.totalorder %s63, 0
      %s66 = sadd.s32 %s65, 1
      %s67 = scalar_select %p64, %s65, %s66
      %p70 = pneg %p64
      %p71 = scmp.eq.s32.totalorder %s17, 48
      %p72 = por %p70, %p71
      %p73 = scmp.ne.s32.totalorder %s65, %s68
      %p74 = scmp.eq.s32.totalorder %s17, 0
      %p75 = por %p73, %p74
      %p76 = scmp.ne.s32.totalorder %s65, %s68
      %p77 = scmp.eq.s32.totalorder %s22, 48
      %p78 = por %p76, %p77
      %p79 = scmp.ne.s32.totalorder %s68, %s69
      %p80 = scmp.eq.s32.totalorder %s22, 0
      %p81 = por %p79, %p80
      %p82 = scmp.ne.s32.totalorder %s68, %s69
      %p83 = scmp.eq.s32.totalorder %s23, 48
      %p84 = por %p82, %p83
      %p86 = scmp.ne.s32.totalorder %s69, %s85
      %p87 = scmp.eq.s32.totalorder %s23, 0
      %p88 = por %p86, %p87
      %s89 = ssub.s32 %s24, %s36
      %s90 = ssub.s32 %s25, %s32
      %s91 = sor.u32 %s89, %s90
      %p92 = scmp.eq.s32.totalorder %s91, 0
      %s94 = sadd.s32 %s93, 1
      %s95 = scalar_select %p92, %s93, %s94
      %p98 = pneg %p92
      %p99 = scmp.eq.s32.totalorder %s17, 48
      %p100 = por %p98, %p99
      %p101 = scmp.ne.s32.totalorder %s93, %s96
      %p102 = scmp.eq.s32.totalorder %s17, 0
      %p103 = por %p101, %p102
      %p104 = scmp.ne.s32.totalorder %s93, %s96
      %p105 = scmp.eq.s32.totalorder %s22, 48
      %p106 = por %p104, %p105
      %p107 = scmp.ne.s32.totalorder %s96, %s97
      %p108 = scmp.eq.s32.totalorder %s22, 0
      %p109 = por %p107, %p108
      %p110 = scmp.ne.s32.totalorder %s96, %s97
      %p111 = scmp.eq.s32.totalorder %s23, 48
      %p112 = por %p110, %p111
      %p114 = scmp.ne.s32.totalorder %s97, %s113
      %p115 = scmp.eq.s32.totalorder %s23, 0
      %p116 = por %p114, %p115
      %s117 = ssub.s32 %s24, %s36
      %s118 = ssub.s32 %s25, %s32
      %s119 = sor.u32 %s117, %s118
      %p120 = scmp.eq.s32.totalorder %s119, 0
      %s122 = sadd.s32 %s121, 1
      %s123 = scalar_select %p120, %s121, %s122
      %p126 = pneg %p120
      %p127 = scmp.eq.s32.totalorder %s17, 48
      %p128 = por %p126, %p127
      %p129 = scmp.ne.s32.totalorder %s121, %s124
      %p130 = scmp.eq.s32.totalorder %s17, 0
      %p131 = por %p129, %p130
      %p132 = scmp.ne.s32.totalorder %s121, %s124
      %p133 = scmp.eq.s32.totalorder %s22, 48
      %p134 = por %p132, %p133
      %p135 = scmp.ne.s32.totalorder %s124, %s125
      %p136 = scmp.eq.s32.totalorder %s22, 0
      %p137 = por %p135, %p136
      %p138 = scmp.ne.s32.totalorder %s124, %s125
      %p139 = scmp.eq.s32.totalorder %s23, 48
      %p140 = por %p138, %p139
      %p142 = scmp.ne.s32.totalorder %s125, %s141
      %p143 = scmp.eq.s32.totalorder %s23, 0
      %p144 = por %p142, %p143
      %s145 = ssub.s32 %s24, %s36
      %s146 = ssub.s32 %s25, %s32
      %s147 = sor.u32 %s145, %s146
      %p148 = scmp.eq.s32.totalorder %s147, 0
      %s150 = sadd.s32 %s149, 1
      %s151 = scalar_select %p148, %s149, %s150
      %p154 = pneg %p148
      %p155 = scmp.eq.s32.totalorder %s17, 48
      %p156 = por %p154, %p155
      %p157 = scmp.ne.s32.totalorder %s149, %s152
      %p158 = scmp.eq.s32.totalorder %s17, 0
      %p159 = por %p157, %p158
      %p160 = scmp.ne.s32.totalorder %s149, %s152
      %p161 = scmp.eq.s32.totalorder %s22, 48
      %p162 = por %p160, %p161
      %p163 = scmp.ne.s32.totalorder %s152, %s153
      %p164 = scmp.eq.s32.totalorder %s22, 0
      %p165 = por %p163, %p164
      %p166 = scmp.ne.s32.totalorder %s152, %s153
      %p167 = scmp.eq.s32.totalorder %s23, 48
      %p168 = por %p166, %p167
      %p170 = scmp.ne.s32.totalorder %s153, %s169
      %p171 = scmp.eq.s32.totalorder %s23, 0
      %p172 = por %p170, %p171
      %p173 = scmp.le.s32.totalorder 1, %s17
      %p174 = scmp.lt.s32.totalorder %s17, 50
      %p175 = pnand %p173, %p174
      %p176 = pneg %p175
      // Predicated region
      $region9: #{tpu_custom_call.1} parent=5 // pred_check
        _
      $region10: #{tpu_custom_call.1} parent=5 // pred_check_branch
        %178 = sbr.rel (%p175) target = $region12
      $region11: #{tpu_custom_call.1} parent=5 // pred_region
        %s179 = ssub.s32 %s17, 1
        // Predicated region
        $region13: #{tpu_custom_call.1} parent=11 // pred_check
          %p180 = pneg %p81
        $region14: #{tpu_custom_call.1} parent=11 // pred_check_branch
          %182 = sbr.rel (%p180) target = $region16
        $region15: #{tpu_custom_call.1} parent=11 // pred_region
          %p183 = scmp.lt.s32.totalorder %s27, 0
          %s184 = scalar_select %p183, %s27, 0
          %s185 = smul.addr %s184, 4
          %s186 = scalar_lea.vmem %s1, %s185
        $region16: #{tpu_custom_call.1} parent=11 // pred_fallthru
          _
      $region12: #{tpu_custom_call.1} parent=5 // pred_fallthru
        _
      %p187 = scmp.lt.s32.totalorder %s17, 49
      // Predicated region
      $region17: #{tpu_custom_call.1} parent=5 // pred_check
        %p188 = pneg %p187
      $region18: #{tpu_custom_call.1} parent=5 // pred_check_branch
        %190 = sbr.rel (%p188) target = $region20
      $region19: #{tpu_custom_call.1} parent=5 // pred_region
        // Predicated region
        $region21: #{tpu_custom_call.1} parent=19 // pred_check
          %p191 = pneg %p49
        $region22: #{tpu_custom_call.1} parent=19 // pred_check_branch
          %193 = sbr.rel (%p191) target = $region24
        $region23: #{tpu_custom_call.1} parent=19 // pred_region
          %s194 = smul.u32 64, %s24
          %p195 = scmp.lt.s32.totalorder %s194, 3135
          %s196 = scalar_select %p195, %s194, 3135
          %s197 = smul.addr %s196, 2
          %s198 = smul.addr %s197, 4
          %s199 = scalar_lea.vmem %s0, %s198
          %s200 = smul.u32 64, %s24
        $region24: #{tpu_custom_call.1} parent=19 // pred_fallthru
          _
      $region20: #{tpu_custom_call.1} parent=5 // pred_fallthru
        _
      %p201 = scmp.le.s32.totalorder 1, %s17
      %p202 = scmp.lt.s32.totalorder %s17, 50
      %p203 = pnand %p201, %p202
      %p204 = pneg %p203
      // Predicated region
      $region25: #{tpu_custom_call.1} parent=5 // pred_check
        _
      $region26: #{tpu_custom_call.1} parent=5 // pred_check_branch
        %206 = sbr.rel (%p203) target = $region28
      $region27: #{tpu_custom_call.1} parent=5 // pred_region
        %s207 = ssub.s32 %s17, 1
        %s208 = smul.u32 64, %s26
        %p209 = scmp.lt.s32.totalorder %s208, 3135
        %s210 = scalar_select %p209, %s208, 3135
        %s211 = smul.addr %s210, 2
        %s212 = smul.addr %s211, 4
        %s213 = scalar_lea.vmem %s0, %s212
        %p214 = pneg %p55
        %p215 = pneg %p52
        %p216 = scmp.lt.s32.totalorder %s27, 0
        %s217 = scalar_select %p216, %s27, 0
        %s218 = smul.addr %s217, 4
        %s219 = scalar_lea.vmem %s1, %s218
        %p220 = pneg %p81
        %p221 = pneg %p78
        %p222 = pneg %p109
        %p223 = pneg %p106
        %s224 = sand.u32 %s96, 1
        %s225 = scalar_lea.sflag [#allocation3], %s224
        %s226 = sand.u32 %s96, 1
        %s227 = smul.addr %s226, 256
        %s228 = scalar_lea.vmem [#allocation2], %s227
        %p229 = pneg %p137
        %p230 = pneg %p134
        %s231 = sand.u32 %s22, 1
        %s232 = scalar_lea.sflag [#allocation5], %s231
        %s233 = sand.u32 %s124, 1
        %s234 = scalar_lea.vmem [#allocation4], %s233
        %p235 = pneg %p165
        %p236 = pneg %p162
        %s237 = sand.u32 %s22, 1
        %s238 = scalar_lea.sflag [#allocation5], %s237
        %s239 = sand.u32 %s152, 1
        %s240 = scalar_lea.vmem [#allocation6], %s239
        %s241 = smul.u32 64, %s26
        %p242 = scmp.lt.s32.totalorder %s241, 3135
        %s243 = scalar_select %p242, %s241, 3135
        %s244 = smul.addr %s243, 2
        %s245 = smul.addr %s244, 4
        %s246 = scalar_lea.vmem %s0, %s245
        %s247 = smul.u32 64, %s26
        %p248 = scmp.lt.s32.totalorder %s27, 0
        %s249 = scalar_select %p248, %s27, 0
        %s250 = smul.addr %s249, 4
        %s251 = scalar_lea.vmem %s1, %s250
        %s252 = smul.u32 64, %s26
        %v254 = vld [vmem:[%s246] sm:$0xff]
        %v255 = vld [vmem:[%s246 + $0x8] sm:$0xff]
        %v256 = vld [vmem:[%s246 + $0x10] sm:$0xff]
        %v257 = vld [vmem:[%s246 + $0x18] sm:$0xff]
        %v258 = vld [vmem:[%s246 + $0x20] sm:$0xff]
        %v259 = vld [vmem:[%s246 + $0x28] sm:$0xff]
        %v260 = vld [vmem:[%s246 + $0x30] sm:$0xff]
        %v261 = vld [vmem:[%s246 + $0x38] sm:$0xff]
        %v262 = vld [vmem:[%s246 + $0x40] sm:$0xff]
        %v263 = vld [vmem:[%s246 + $0x48] sm:$0xff]
        %v264 = vld [vmem:[%s246 + $0x50] sm:$0xff]
        %v265 = vld [vmem:[%s246 + $0x58] sm:$0xff]
        %v266 = vld [vmem:[%s246 + $0x60] sm:$0xff]
        %v267 = vld [vmem:[%s246 + $0x68] sm:$0xff]
        %v268 = vld [vmem:[%s246 + $0x70] sm:$0xff]
        %v269 = vld [vmem:[%s246 + $0x78] sm:$0xff]
        %v270 = vld [vmem:[%s246 + $0x80] sm:$0xff]
        %v271 = vld [vmem:[%s246 + $0x88] sm:$0xff]
        %v272 = vld [vmem:[%s246 + $0x90] sm:$0xff]
        %v273 = vld [vmem:[%s246 + $0x98] sm:$0xff]
        %v274 = vld [vmem:[%s246 + $0xa0] sm:$0xff]
        %v275 = vld [vmem:[%s246 + $0xa8] sm:$0xff]
        %v276 = vld [vmem:[%s246 + $0xb0] sm:$0xff]
        %v277 = vld [vmem:[%s246 + $0xb8] sm:$0xff]
        %v278 = vld [vmem:[%s246 + $0xc0] sm:$0xff]
        %v279 = vld [vmem:[%s246 + $0xc8] sm:$0xff]
        %v280 = vld [vmem:[%s246 + $0xd0] sm:$0xff]
        %v281 = vld [vmem:[%s246 + $0xd8] sm:$0xff]
        %v282 = vld [vmem:[%s246 + $0xe0] sm:$0xff]
        %v283 = vld [vmem:[%s246 + $0xe8] sm:$0xff]
        %v284 = vld [vmem:[%s246 + $0xf0] sm:$0xff]
        %v285 = vld [vmem:[%s246 + $0xf8] sm:$0xff]
        %v286 = vld [vmem:[%s246 + $0x100] sm:$0xff]
        %v287 = vld [vmem:[%s246 + $0x108] sm:$0xff]
        %v288 = vld [vmem:[%s246 + $0x110] sm:$0xff]
        %v289 = vld [vmem:[%s246 + $0x118] sm:$0xff]
        %v290 = vld [vmem:[%s246 + $0x120] sm:$0xff]
        %v291 = vld [vmem:[%s246 + $0x128] sm:$0xff]
        %v292 = vld [vmem:[%s246 + $0x130] sm:$0xff]
        %v293 = vld [vmem:[%s246 + $0x138] sm:$0xff]
        %v294 = vld [vmem:[%s246 + $0x140] sm:$0xff]
        %v295 = vld [vmem:[%s246 + $0x148] sm:$0xff]
        %v296 = vld [vmem:[%s246 + $0x150] sm:$0xff]
        %v297 = vld [vmem:[%s246 + $0x158] sm:$0xff]
        %v298 = vld [vmem:[%s246 + $0x160] sm:$0xff]
        %v299 = vld [vmem:[%s246 + $0x168] sm:$0xff]
        %v300 = vld [vmem:[%s246 + $0x170] sm:$0xff]
        %v301 = vld [vmem:[%s246 + $0x178] sm:$0xff]
        %v302 = vld [vmem:[%s246 + $0x180] sm:$0xff]
        %v303 = vld [vmem:[%s246 + $0x188] sm:$0xff]
        %v304 = vld [vmem:[%s246 + $0x190] sm:$0xff]
        %v305 = vld [vmem:[%s246 + $0x198] sm:$0xff]
        %v306 = vld [vmem:[%s246 + $0x1a0] sm:$0xff]
        %v307 = vld [vmem:[%s246 + $0x1a8] sm:$0xff]
        %v308 = vld [vmem:[%s246 + $0x1b0] sm:$0xff]
        %v309 = vld [vmem:[%s246 + $0x1b8] sm:$0xff]
        %v310 = vld [vmem:[%s246 + $0x1c0] sm:$0xff]
        %v311 = vld [vmem:[%s246 + $0x1c8] sm:$0xff]
        %v312 = vld [vmem:[%s246 + $0x1d0] sm:$0xff]
        %v313 = vld [vmem:[%s246 + $0x1d8] sm:$0xff]
        %v314 = vld [vmem:[%s246 + $0x1e0] sm:$0xff]
        %v315 = vld [vmem:[%s246 + $0x1e8] sm:$0xff]
        %v316 = vld [vmem:[%s246 + $0x1f0] sm:$0xff]
        %v317 = vld [vmem:[%s246 + $0x1f8] sm:$0xff]
        %v318 = vld [vmem:[%s251] sm:$0xf]
        %v319 = vld [vmem:[%s251 + $0x4] sm:$0xf]
        %v320 = vld [vmem:[%s251 + $0x8] sm:$0xf]
        %v321 = vld [vmem:[%s251 + $0xc] sm:$0xf]
        %v322 = vld [vmem:[%s251 + $0x10] sm:$0xf]
        %v323 = vld [vmem:[%s251 + $0x14] sm:$0xf]
        %v324 = vld [vmem:[%s251 + $0x18] sm:$0xf]
        %v325 = vld [vmem:[%s251 + $0x1c] sm:$0xf]
        %v326 = vld [vmem:[%s251 + $0x20] sm:$0xf]
        %v327 = vld [vmem:[%s251 + $0x24] sm:$0xf]
        %v328 = vld [vmem:[%s251 + $0x28] sm:$0xf]
        %v329 = vld [vmem:[%s251 + $0x2c] sm:$0xf]
        %v330 = vld [vmem:[%s251 + $0x30] sm:$0xf]
        %v331 = vld [vmem:[%s251 + $0x34] sm:$0xf]
        %v332 = vld [vmem:[%s251 + $0x38] sm:$0xf]
        %v333 = vld [vmem:[%s251 + $0x3c] sm:$0xf]
        %v334 = vld [vmem:[%s251 + $0x40] sm:$0xf]
        %v335 = vld [vmem:[%s251 + $0x44] sm:$0xf]
        %v336 = vld [vmem:[%s251 + $0x48] sm:$0x3]
        %v401 = vunpack.c.l.b16 %v254
        %v402 = vunpack.c.h.b16 %v254
        %v403 = vunpack.c.l.b16 %v255
        %v404 = vunpack.c.h.b16 %v255
        %v405 = vunpack.c.l.b16 %v256
        %v406 = vunpack.c.h.b16 %v256
        %v407 = vunpack.c.l.b16 %v257
        %v408 = vunpack.c.h.b16 %v257
        %v409 = vunpack.c.l.b16 %v258
        %v410 = vunpack.c.h.b16 %v258
        %v411 = vunpack.c.l.b16 %v259
        %v412 = vunpack.c.h.b16 %v259
        %v413 = vunpack.c.l.b16 %v260
        %v414 = vunpack.c.h.b16 %v260
        %v415 = vunpack.c.l.b16 %v261
        %v416 = vunpack.c.h.b16 %v261
        %v417 = vunpack.c.l.b16 %v262
        %v418 = vunpack.c.h.b16 %v262
        %v419 = vunpack.c.l.b16 %v263
        %v420 = vunpack.c.h.b16 %v263
        %v421 = vunpack.c.l.b16 %v264
        %v422 = vunpack.c.h.b16 %v264
        %v423 = vunpack.c.l.b16 %v265
        %v424 = vunpack.c.h.b16 %v265
        %v425 = vunpack.c.l.b16 %v266
        %v426 = vunpack.c.h.b16 %v266
        %v427 = vunpack.c.l.b16 %v267
        %v428 = vunpack.c.h.b16 %v267
        %v429 = vunpack.c.l.b16 %v268
        %v430 = vunpack.c.h.b16 %v268
        %v431 = vunpack.c.l.b16 %v269
        %v432 = vunpack.c.h.b16 %v269
        %v433 = vunpack.c.l.b16 %v270
        %v434 = vunpack.c.h.b16 %v270
        %v435 = vunpack.c.l.b16 %v271
        %v436 = vunpack.c.h.b16 %v271
        %v437 = vunpack.c.l.b16 %v272
        %v438 = vunpack.c.h.b16 %v272
        %v439 = vunpack.c.l.b16 %v273
        %v440 = vunpack.c.h.b16 %v273
        %v441 = vunpack.c.l.b16 %v274
        %v442 = vunpack.c.h.b16 %v274
        %v443 = vunpack.c.l.b16 %v275
        %v444 = vunpack.c.h.b16 %v275
        %v445 = vunpack.c.l.b16 %v276
        %v446 = vunpack.c.h.b16 %v276
        %v447 = vunpack.c.l.b16 %v277
        %v448 = vunpack.c.h.b16 %v277
        %v449 = vunpack.c.l.b16 %v278
        %v450 = vunpack.c.h.b16 %v278
        %v451 = vunpack.c.l.b16 %v279
        %v452 = vunpack.c.h.b16 %v279
        %v453 = vunpack.c.l.b16 %v280
        %v454 = vunpack.c.h.b16 %v280
        %v455 = vunpack.c.l.b16 %v281
        %v456 = vunpack.c.h.b16 %v281
        %v457 = vunpack.c.l.b16 %v282
        %v458 = vunpack.c.h.b16 %v282
        %v459 = vunpack.c.l.b16 %v283
        %v460 = vunpack.c.h.b16 %v283
        %v461 = vunpack.c.l.b16 %v284
        %v462 = vunpack.c.h.b16 %v284
        %v463 = vunpack.c.l.b16 %v285
        %v464 = vunpack.c.h.b16 %v285
        %v465 = vunpack.c.l.b16 %v286
        %v466 = vunpack.c.h.b16 %v286
        %v467 = vunpack.c.l.b16 %v287
        %v468 = vunpack.c.h.b16 %v287
        %v469 = vunpack.c.l.b16 %v288
        %v470 = vunpack.c.h.b16 %v288
        %v471 = vunpack.c.l.b16 %v289
        %v472 = vunpack.c.h.b16 %v289
        %v473 = vunpack.c.l.b16 %v290
        %v474 = vunpack.c.h.b16 %v290
        %v475 = vunpack.c.l.b16 %v291
        %v476 = vunpack.c.h.b16 %v291
        %v477 = vunpack.c.l.b16 %v292
        %v478 = vunpack.c.h.b16 %v292
        %v479 = vunpack.c.l.b16 %v293
        %v480 = vunpack.c.h.b16 %v293
        %v481 = vunpack.c.l.b16 %v294
        %v482 = vunpack.c.h.b16 %v294
        %v483 = vunpack.c.l.b16 %v295
        %v484 = vunpack.c.h.b16 %v295
        %v485 = vunpack.c.l.b16 %v296
        %v486 = vunpack.c.h.b16 %v296
        %v487 = vunpack.c.l.b16 %v297
        %v488 = vunpack.c.h.b16 %v297
        %v489 = vunpack.c.l.b16 %v298
        %v490 = vunpack.c.h.b16 %v298
        %v491 = vunpack.c.l.b16 %v299
        %v492 = vunpack.c.h.b16 %v299
        %v493 = vunpack.c.l.b16 %v300
        %v494 = vunpack.c.h.b16 %v300
        %v495 = vunpack.c.l.b16 %v301
        %v496 = vunpack.c.h.b16 %v301
        %v497 = vunpack.c.l.b16 %v302
        %v498 = vunpack.c.h.b16 %v302
        %v499 = vunpack.c.l.b16 %v303
        %v500 = vunpack.c.h.b16 %v303
        %v501 = vunpack.c.l.b16 %v304
        %v502 = vunpack.c.h.b16 %v304
        %v503 = vunpack.c.l.b16 %v305
        %v504 = vunpack.c.h.b16 %v305
        %v505 = vunpack.c.l.b16 %v306
        %v506 = vunpack.c.h.b16 %v306
        %v507 = vunpack.c.l.b16 %v307
        %v508 = vunpack.c.h.b16 %v307
        %v509 = vunpack.c.l.b16 %v308
        %v510 = vunpack.c.h.b16 %v308
        %v511 = vunpack.c.l.b16 %v309
        %v512 = vunpack.c.h.b16 %v309
        %v513 = vunpack.c.l.b16 %v310
        %v514 = vunpack.c.h.b16 %v310
        %v515 = vunpack.c.l.b16 %v311
        %v516 = vunpack.c.h.b16 %v311
        %v517 = vunpack.c.l.b16 %v312
        %v518 = vunpack.c.h.b16 %v312
        %v519 = vunpack.c.l.b16 %v313
        %v520 = vunpack.c.h.b16 %v313
        %v521 = vunpack.c.l.b16 %v314
        %v522 = vunpack.c.h.b16 %v314
        %v523 = vunpack.c.l.b16 %v315
        %v524 = vunpack.c.h.b16 %v315
        %v525 = vunpack.c.l.b16 %v316
        %v526 = vunpack.c.h.b16 %v316
        %v527 = vunpack.c.l.b16 %v317
        %v528 = vunpack.c.h.b16 %v317
        %v529 = vpack.c.b16 %v403, %v401
        %v530 = vpack.c.b16 %v404, %v402
        %v531 = vpack.c.b16 %v407, %v405
        %v532 = vpack.c.b16 %v408, %v406
        %v533 = vpack.c.b16 %v411, %v409
        %v534 = vpack.c.b16 %v412, %v410
        %v535 = vpack.c.b16 %v415, %v413
        %v536 = vpack.c.b16 %v416, %v414
        %v537 = vpack.c.b16 %v419, %v417
        %v538 = vpack.c.b16 %v420, %v418
        %v539 = vpack.c.b16 %v423, %v421
        %v540 = vpack.c.b16 %v424, %v422
        %v541 = vpack.c.b16 %v427, %v425
        %v542 = vpack.c.b16 %v428, %v426
        %v543 = vpack.c.b16 %v431, %v429
        %v544 = vpack.c.b16 %v432, %v430
        %v545 = vpack.c.b16 %v435, %v433
        %v546 = vpack.c.b16 %v436, %v434
        %v547 = vpack.c.b16 %v439, %v437
        %v548 = vpack.c.b16 %v440, %v438
        %v549 = vpack.c.b16 %v443, %v441
        %v550 = vpack.c.b16 %v444, %v442
        %v551 = vpack.c.b16 %v447, %v445
        %v552 = vpack.c.b16 %v448, %v446
        %v553 = vpack.c.b16 %v451, %v449
        %v554 = vpack.c.b16 %v452, %v450
        %v555 = vpack.c.b16 %v455, %v453
        %v556 = vpack.c.b16 %v456, %v454
        %v557 = vpack.c.b16 %v459, %v457
        %v558 = vpack.c.b16 %v460, %v458
        %v559 = vpack.c.b16 %v463, %v461
        %v560 = vpack.c.b16 %v464, %v462
        %v561 = vpack.c.b16 %v467, %v465
        %v562 = vpack.c.b16 %v468, %v466
        %v563 = vpack.c.b16 %v471, %v469
        %v564 = vpack.c.b16 %v472, %v470
        %v565 = vpack.c.b16 %v475, %v473
        %v566 = vpack.c.b16 %v476, %v474
        %v567 = vpack.c.b16 %v479, %v477
        %v568 = vpack.c.b16 %v480, %v478
        %v569 = vpack.c.b16 %v483, %v481
        %v570 = vpack.c.b16 %v484, %v482
        %v571 = vpack.c.b16 %v487, %v485
        %v572 = vpack.c.b16 %v488, %v486
        %v573 = vpack.c.b16 %v491, %v489
        %v574 = vpack.c.b16 %v492, %v490
        %v575 = vpack.c.b16 %v495, %v493
        %v576 = vpack.c.b16 %v496, %v494
        %v577 = vpack.c.b16 %v499, %v497
        %v578 = vpack.c.b16 %v500, %v498
        %v579 = vpack.c.b16 %v503, %v501
        %v580 = vpack.c.b16 %v504, %v502
        %v581 = vpack.c.b16 %v507, %v505
        %v582 = vpack.c.b16 %v508, %v506
        %v583 = vpack.c.b16 %v511, %v509
        %v584 = vpack.c.b16 %v512, %v510
        %v585 = vpack.c.b16 %v515, %v513
        %v586 = vpack.c.b16 %v516, %v514
        %v587 = vpack.c.b16 %v519, %v517
        %v588 = vpack.c.b16 %v520, %v518
        %v589 = vpack.c.b16 %v523, %v521
        %v590 = vpack.c.b16 %v524, %v522
        %v591 = vpack.c.b16 %v527, %v525
        %v592 = vpack.c.b16 %v528, %v526
        %v644 = vunpack.c.l.b16 %v318
        %v645 = vunpack.c.l.b16 %v319
        %v646 = vunpack.c.l.b16 %v320
        %v647 = vunpack.c.l.b16 %v321
        %v648 = vunpack.c.l.b16 %v322
        %v649 = vunpack.c.l.b16 %v323
        %v650 = vunpack.c.l.b16 %v324
        %v651 = vunpack.c.l.b16 %v325
        %v652 = vunpack.c.l.b16 %v326
        %v653 = vunpack.c.l.b16 %v327
        %v654 = vunpack.c.l.b16 %v328
        %v655 = vunpack.c.l.b16 %v329
        %v656 = vunpack.c.l.b16 %v330
        %v657 = vunpack.c.l.b16 %v331
        %v658 = vunpack.c.l.b16 %v332
        %v659 = vunpack.c.l.b16 %v333
        %v660 = vunpack.c.l.b16 %v334
        %v661 = vunpack.c.l.b16 %v335
        %v662 = vunpack.c.l.b16 %v336
        %v663 = vpack.c.b16 %v645, %v644
        %v664 = vpack.c.b16 %v647, %v646
        %v665 = vpack.c.b16 %v649, %v648
        %v666 = vpack.c.b16 %v651, %v650
        %v667 = vpack.c.b16 %v653, %v652
        %v668 = vpack.c.b16 %v655, %v654
        %v669 = vpack.c.b16 %v657, %v656
        %v670 = vpack.c.b16 %v659, %v658
        %v671 = vpack.c.b16 %v661, %v660
        %v672 = vpack.c.b16 %v662, %v662
        %vm682 = vcmask 154624
        %v684 = vsel %vm682, %v530, 0
        %v687 = vsel %vm682, %v532, 0
        %v690 = vsel %vm682, %v534, 0
        %v693 = vsel %vm682, %v536, 0
        %v696 = vsel %vm682, %v538, 0
        %v699 = vsel %vm682, %v540, 0
        %v702 = vsel %vm682, %v542, 0
        %v705 = vsel %vm682, %v544, 0
        %v708 = vsel %vm682, %v546, 0
        %v711 = vsel %vm682, %v548, 0
        %v714 = vsel %vm682, %v550, 0
        %v717 = vsel %vm682, %v552, 0
        %v720 = vsel %vm682, %v554, 0
        %v723 = vsel %vm682, %v556, 0
        %v726 = vsel %vm682, %v558, 0
        %v729 = vsel %vm682, %v560, 0
        %v732 = vsel %vm682, %v562, 0
        %v735 = vsel %vm682, %v564, 0
        %v738 = vsel %vm682, %v566, 0
        %v741 = vsel %vm682, %v568, 0
        %v744 = vsel %vm682, %v570, 0
        %v747 = vsel %vm682, %v572, 0
        %v750 = vsel %vm682, %v574, 0
        %v753 = vsel %vm682, %v576, 0
        %v756 = vsel %vm682, %v578, 0
        %v759 = vsel %vm682, %v580, 0
        %v762 = vsel %vm682, %v582, 0
        %v765 = vsel %vm682, %v584, 0
        %v768 = vsel %vm682, %v586, 0
        %v771 = vsel %vm682, %v588, 0
        %v774 = vsel %vm682, %v590, 0
        %v777 = vsel %vm682, %v592, 0
        %vm779 = vcmask 1040384
        %vm780 = vcmask 1041408
        %v781 = vsel %vm779, 4294967295, 65535
        %v782 = vsel %vm780, %v781, 0
        %v784 = vand.u32 %v672, %v782
        %786 = vmatprep.subr.bf16.mxu0 0
        %787 = vmatpush1.bf16.msra.mxu0 %v663
        %788 = vmatprep.subr.bf16.mxu0 0
        %789 = vmatpush1.bf16.msra.mxu0 %v664
        %790 = vmatprep.subr.bf16.mxu0 0
        %791 = vmatpush1.bf16.msra.mxu0 %v665
        %792 = vmatprep.subr.bf16.mxu0 0
        %793 = vmatpush1.bf16.msra.mxu0 %v666
        %794 = vmatprep.subr.bf16.mxu0 0
        %795 = vmatpush1.bf16.msra.mxu0 %v667
        %796 = vmatprep.subr.bf16.mxu0 0
        %797 = vmatpush1.bf16.msra.mxu0 %v668
        %798 = vmatprep.subr.bf16.mxu0 0
        %799 = vmatpush1.bf16.msra.mxu0 %v669
        %800 = vmatprep.subr.bf16.mxu0 0
        %801 = vmatpush1.bf16.msra.mxu0 %v670
        %802 = vmatprep.subr.bf16.mxu0 0
        %803 = vmatpush1.bf16.msra.mxu0 %v671
        %804 = vmatprep.subr.bf16.mxu0 0
        %805 = vmatpush1.bf16.msra.mxu0 %v784
        %806 = vmatprep.subr.bf16.mxu0 0
        %807 = vmatpush1.bf16.msra.mxu0 0
        %808 = vmatprep.subr.bf16.mxu0 0
        %809 = vmatpush1.bf16.msra.mxu0 0
        %810 = vmatprep.subr.bf16.mxu0 0
        %811 = vmatpush1.bf16.msra.mxu0 0
        %812 = vmatprep.subr.bf16.mxu0 0
        %813 = vmatpush1.bf16.msra.mxu0 0
        %814 = vmatprep.subr.bf16.mxu0 0
        %815 = vmatpush1.bf16.msra.mxu0 0
        %816 = vmatprep.subr.bf16.mxu0 0
        %817 = vmatpush1.bf16.msra.mxu0 0
        %818 = vmatprep.mubr.bf16.mxu0 %v684
        %819 = vmatmul.mubr.bf16.gmra.mrb[0].mxu0 %v529
        %v820 = vpop.f32.mrb[0].mxu0
        %v821 = vadd.f32 0.0, %v820
        %v822 = vpop.f32.mrb[0].mxu0
        %v823 = vpop.f32.mrb[0].mxu0
        %v824 = vadd.f32 0.0, %v823
        %v825 = vpop.f32.mrb[0].mxu0
        %826 = vmatprep.mubr.bf16.mxu0 %v687
        %827 = vmatmul.mubr.bf16.gmra.mrb[0].mxu0 %v531
        %v828 = vpop.f32.mrb[0].mxu0
        %v829 = vadd.f32 0.0, %v828
        %v830 = vpop.f32.mrb[0].mxu0
        %v831 = vpop.f32.mrb[0].mxu0
        %v832 = vadd.f32 0.0, %v831
        %v833 = vpop.f32.mrb[0].mxu0
        %834 = vmatprep.mubr.bf16.mxu0 %v690
        %835 = vmatmul.mubr.bf16.gmra.mrb[0].mxu0 %v533
        %v836 = vpop.f32.mrb[0].mxu0
        %v837 = vadd.f32 0.0, %v836
        %v838 = vpop.f32.mrb[0].mxu0
        %v839 = vpop.f32.mrb[0].mxu0
        %v840 = vadd.f32 0.0, %v839
        %v841 = vpop.f32.mrb[0].mxu0
        %842 = vmatprep.mubr.bf16.mxu0 %v693
        %843 = vmatmul.mubr.bf16.gmra.mrb[0].mxu0 %v535
        %v844 = vpop.f32.mrb[0].mxu0
        %v845 = vadd.f32 0.0, %v844
        %v846 = vpop.f32.mrb[0].mxu0
        %v847 = vpop.f32.mrb[0].mxu0
        %v848 = vadd.f32 0.0, %v847
        %v849 = vpop.f32.mrb[0].mxu0
        %850 = vmatprep.mubr.bf16.mxu0 %v696
        %851 = vmatmul.mubr.bf16.gmra.mrb[0].mxu0 %v537
        %v852 = vpop.f32.mrb[0].mxu0
        %v853 = vadd.f32 0.0, %v852
        %v854 = vpop.f32.mrb[0].mxu0
        %v855 = vpop.f32.mrb[0].mxu0
        %v856 = vadd.f32 0.0, %v855
        %v857 = vpop.f32.mrb[0].mxu0
        %858 = vmatprep.mubr.bf16.mxu0 %v699
        %859 = vmatmul.mubr.bf16.gmra.mrb[0].mxu0 %v539
        %v860 = vpop.f32.mrb[0].mxu0
        %v861 = vadd.f32 0.0, %v860
        %v862 = vpop.f32.mrb[0].mxu0
        %v863 = vpop.f32.mrb[0].mxu0
        %v864 = vadd.f32 0.0, %v863
        %v865 = vpop.f32.mrb[0].mxu0
        %866 = vmatprep.mubr.bf16.mxu0 %v702
        %867 = vmatmul.mubr.bf16.gmra.mrb[0].mxu0 %v541
        %v868 = vpop.f32.mrb[0].mxu0
        %v869 = vadd.f32 0.0, %v868
        %v870 = vpop.f32.mrb[0].mxu0
        %v871 = vpop.f32.mrb[0].mxu0
        %v872 = vadd.f32 0.0, %v871
        %v873 = vpop.f32.mrb[0].mxu0
        %874 = vmatprep.mubr.bf16.mxu0 %v705
        %875 = vmatmul.mubr.bf16.gmra.mrb[0].mxu0 %v543
        %v876 = vpop.f32.mrb[0].mxu0
        %v877 = vadd.f32 0.0, %v876
        %v878 = vpop.f32.mrb[0].mxu0
        %v879 = vpop.f32.mrb[0].mxu0
        %v880 = vadd.f32 0.0, %v879
        %v881 = vpop.f32.mrb[0].mxu0
        %882 = vmatprep.mubr.bf16.mxu0 %v708
        %883 = vmatmul.mubr.bf16.gmra.mrb[0].mxu0 %v545
        %v884 = vpop.f32.mrb[0].mxu0
        %v885 = vadd.f32 0.0, %v884
        %v886 = vpop.f32.mrb[0].mxu0
        %v887 = vpop.f32.mrb[0].mxu0
        %v888 = vadd.f32 0.0, %v887
        %v889 = vpop.f32.mrb[0].mxu0
        %890 = vmatprep.mubr.bf16.mxu0 %v711
        %891 = vmatmul.mubr.bf16.gmra.mrb[0].mxu0 %v547
        %v892 = vpop.f32.mrb[0].mxu0
        %v893 = vadd.f32 0.0, %v892
        %v894 = vpop.f32.mrb[0].mxu0
        %v895 = vpop.f32.mrb[0].mxu0
        %v896 = vadd.f32 0.0, %v895
        %v897 = vpop.f32.mrb[0].mxu0
        %898 = vmatprep.mubr.bf16.mxu0 %v714
        %899 = vmatmul.mubr.bf16.gmra.mrb[0].mxu0 %v549
        %v900 = vpop.f32.mrb[0].mxu0
        %v901 = vadd.f32 0.0, %v900
        %v902 = vpop.f32.mrb[0].mxu0
        %v903 = vpop.f32.mrb[0].mxu0
        %v904 = vadd.f32 0.0, %v903
        %v905 = vpop.f32.mrb[0].mxu0
        %906 = vmatprep.mubr.bf16.mxu0 %v717
        %907 = vmatmul.mubr.bf16.gmra.mrb[0].mxu0 %v551
        %v908 = vpop.f32.mrb[0].mxu0
        %v909 = vadd.f32 0.0, %v908
        %v910 = vpop.f32.mrb[0].mxu0
        %v911 = vpop.f32.mrb[0].mxu0
        %v912 = vadd.f32 0.0, %v911
        %v913 = vpop.f32.mrb[0].mxu0
        %914 = vmatprep.mubr.bf16.mxu0 %v720
        %915 = vmatmul.mubr.bf16.gmra.mrb[0].mxu0 %v553
        %v916 = vpop.f32.mrb[0].mxu0
        %v917 = vadd.f32 0.0, %v916
        %v918 = vpop.f32.mrb[0].mxu0
        %v919 = vpop.f32.mrb[0].mxu0
        %v920 = vadd.f32 0.0, %v919
        %v921 = vpop.f32.mrb[0].mxu0
        %922 = vmatprep.mubr.bf16.mxu0 %v723
        %923 = vmatmul.mubr.bf16.gmra.mrb[0].mxu0 %v555
        %v924 = vpop.f32.mrb[0].mxu0
        %v925 = vadd.f32 0.0, %v924
        %v926 = vpop.f32.mrb[0].mxu0
        %v927 = vpop.f32.mrb[0].mxu0
        %v928 = vadd.f32 0.0, %v927
        %v929 = vpop.f32.mrb[0].mxu0
        %930 = vmatprep.mubr.bf16.mxu0 %v726
        %931 = vmatmul.mubr.bf16.gmra.mrb[0].mxu0 %v557
        %v932 = vpop.f32.mrb[0].mxu0
        %v933 = vadd.f32 0.0, %v932
        %v934 = vpop.f32.mrb[0].mxu0
        %v935 = vpop.f32.mrb[0].mxu0
        %v936 = vadd.f32 0.0, %v935
        %v937 = vpop.f32.mrb[0].mxu0
        %938 = vmatprep.mubr.bf16.mxu0 %v729
        %939 = vmatmul.mubr.bf16.gmra.mrb[0].mxu0 %v559
        %v940 = vpop.f32.mrb[0].mxu0
        %v941 = vadd.f32 0.0, %v940
        %v942 = vpop.f32.mrb[0].mxu0
        %v943 = vpop.f32.mrb[0].mxu0
        %v944 = vadd.f32 0.0, %v943
        %v945 = vpop.f32.mrb[0].mxu0
        %946 = vmatprep.mubr.bf16.mxu0 %v732
        %947 = vmatmul.mubr.bf16.gmra.mrb[0].mxu0 %v561
        %v948 = vpop.f32.mrb[0].mxu0
        %v949 = vadd.f32 0.0, %v948
        %v950 = vpop.f32.mrb[0].mxu0
        %v951 = vpop.f32.mrb[0].mxu0
        %v952 = vadd.f32 0.0, %v951
        %v953 = vpop.f32.mrb[0].mxu0
        %954 = vmatprep.mubr.bf16.mxu0 %v735
        %955 = vmatmul.mubr.bf16.gmra.mrb[0].mxu0 %v563
        %v956 = vpop.f32.mrb[0].mxu0
        %v957 = vadd.f32 0.0, %v956
        %v958 = vpop.f32.mrb[0].mxu0
        %v959 = vpop.f32.mrb[0].mxu0
        %v960 = vadd.f32 0.0, %v959
        %v961 = vpop.f32.mrb[0].mxu0
        %962 = vmatprep.mubr.bf16.mxu0 %v738
        %963 = vmatmul.mubr.bf16.gmra.mrb[0].mxu0 %v565
        %v964 = vpop.f32.mrb[0].mxu0
        %v965 = vadd.f32 0.0, %v964
        %v966 = vpop.f32.mrb[0].mxu0
        %v967 = vpop.f32.mrb[0].mxu0
        %v968 = vadd.f32 0.0, %v967
        %v969 = vpop.f32.mrb[0].mxu0
        %970 = vmatprep.mubr.bf16.mxu0 %v741
        %971 = vmatmul.mubr.bf16.gmra.mrb[0].mxu0 %v567
        %v972 = vpop.f32.mrb[0].mxu0
        %v973 = vadd.f32 0.0, %v972
        %v974 = vpop.f32.mrb[0].mxu0
        %v975 = vpop.f32.mrb[0].mxu0
        %v976 = vadd.f32 0.0, %v975
        %v977 = vpop.f32.mrb[0].mxu0
        %978 = vmatprep.mubr.bf16.mxu0 %v744
        %979 = vmatmul.mubr.bf16.gmra.mrb[0].mxu0 %v569
        %v980 = vpop.f32.mrb[0].mxu0
        %v981 = vadd.f32 0.0, %v980
        %v982 = vpop.f32.mrb[0].mxu0
        %v983 = vpop.f32.mrb[0].mxu0
        %v984 = vadd.f32 0.0, %v983
        %v985 = vpop.f32.mrb[0].mxu0
        %986 = vmatprep.mubr.bf16.mxu0 %v747
        %987 = vmatmul.mubr.bf16.gmra.mrb[0].mxu0 %v571
        %v988 = vpop.f32.mrb[0].mxu0
        %v989 = vadd.f32 0.0, %v988
        %v990 = vpop.f32.mrb[0].mxu0
        %v991 = vpop.f32.mrb[0].mxu0
        %v992 = vadd.f32 0.0, %v991
        %v993 = vpop.f32.mrb[0].mxu0
        %994 = vmatprep.mubr.bf16.mxu0 %v750
        %995 = vmatmul.mubr.bf16.gmra.mrb[0].mxu0 %v573
        %v996 = vpop.f32.mrb[0].mxu0
        %v997 = vadd.f32 0.0, %v996
        %v998 = vpop.f32.mrb[0].mxu0
        %v999 = vpop.f32.mrb[0].mxu0
        %v1000 = vadd.f32 0.0, %v999
        %v1001 = vpop.f32.mrb[0].mxu0
        %1002 = vmatprep.mubr.bf16.mxu0 %v753
        %1003 = vmatmul.mubr.bf16.gmra.mrb[0].mxu0 %v575
        %v1004 = vpop.f32.mrb[0].mxu0
        %v1005 = vadd.f32 0.0, %v1004
        %v1006 = vpop.f32.mrb[0].mxu0
        %v1007 = vpop.f32.mrb[0].mxu0
        %v1008 = vadd.f32 0.0, %v1007
        %v1009 = vpop.f32.mrb[0].mxu0
        %1010 = vmatprep.mubr.bf16.mxu0 %v756
        %1011 = vmatmul.mubr.bf16.gmra.mrb[0].mxu0 %v577
        %v1012 = vpop.f32.mrb[0].mxu0
        %v1013 = vadd.f32 0.0, %v1012
        %v1014 = vpop.f32.mrb[0].mxu0
        %v1015 = vpop.f32.mrb[0].mxu0
        %v1016 = vadd.f32 0.0, %v1015
        %v1017 = vpop.f32.mrb[0].mxu0
        %1018 = vmatprep.mubr.bf16.mxu0 %v759
        %1019 = vmatmul.mubr.bf16.gmra.mrb[0].mxu0 %v579
        %v1020 = vpop.f32.mrb[0].mxu0
        %v1021 = vadd.f32 0.0, %v1020
        %v1022 = vpop.f32.mrb[0].mxu0
        %v1023 = vpop.f32.mrb[0].mxu0
        %v1024 = vadd.f32 0.0, %v1023
        %v1025 = vpop.f32.mrb[0].mxu0
        %1026 = vmatprep.mubr.bf16.mxu0 %v762
        %1027 = vmatmul.mubr.bf16.gmra.mrb[0].mxu0 %v581
        %v1028 = vpop.f32.mrb[0].mxu0
        %v1029 = vadd.f32 0.0, %v1028
        %v1030 = vpop.f32.mrb[0].mxu0
        %v1031 = vpop.f32.mrb[0].mxu0
        %v1032 = vadd.f32 0.0, %v1031
        %v1033 = vpop.f32.mrb[0].mxu0
        %1034 = vmatprep.mubr.bf16.mxu0 %v765
        %1035 = vmatmul.mubr.bf16.gmra.mrb[0].mxu0 %v583
        %v1036 = vpop.f32.mrb[0].mxu0
        %v1037 = vadd.f32 0.0, %v1036
        %v1038 = vpop.f32.mrb[0].mxu0
        %v1039 = vpop.f32.mrb[0].mxu0
        %v1040 = vadd.f32 0.0, %v1039
        %v1041 = vpop.f32.mrb[0].mxu0
        %1042 = vmatprep.mubr.bf16.mxu0 %v768
        %1043 = vmatmul.mubr.bf16.gmra.mrb[0].mxu0 %v585
        %v1044 = vpop.f32.mrb[0].mxu0
        %v1045 = vadd.f32 0.0, %v1044
        %v1046 = vpop.f32.mrb[0].mxu0
        %v1047 = vpop.f32.mrb[0].mxu0
        %v1048 = vadd.f32 0.0, %v1047
        %v1049 = vpop.f32.mrb[0].mxu0
        %1050 = vmatprep.mubr.bf16.mxu0 %v771
        %1051 = vmatmul.mubr.bf16.gmra.mrb[0].mxu0 %v587
        %v1052 = vpop.f32.mrb[0].mxu0
        %v1053 = vadd.f32 0.0, %v1052
        %v1054 = vpop.f32.mrb[0].mxu0
        %v1055 = vpop.f32.mrb[0].mxu0
        %v1056 = vadd.f32 0.0, %v1055
        %v1057 = vpop.f32.mrb[0].mxu0
        %1058 = vmatprep.mubr.bf16.mxu0 %v774
        %1059 = vmatmul.mubr.bf16.gmra.mrb[0].mxu0 %v589
        %v1060 = vpop.f32.mrb[0].mxu0
        %v1061 = vadd.f32 0.0, %v1060
        %v1062 = vpop.f32.mrb[0].mxu0
        %v1063 = vpop.f32.mrb[0].mxu0
        %v1064 = vadd.f32 0.0, %v1063
        %v1065 = vpop.f32.mrb[0].mxu0
        %1066 = vmatprep.mubr.bf16.mxu0 %v777
        %1067 = vmatmul.mubr.bf16.gmra.mrb[0].mxu0 %v591
        %v1068 = vpop.f32.mrb[0].mxu0
        %v1069 = vadd.f32 0.0, %v1068
        %v1070 = vpop.f32.mrb[0].mxu0
        %v1071 = vpop.f32.mrb[0].mxu0
        %v1072 = vadd.f32 0.0, %v1071
        %v1073 = vpop.f32.mrb[0].mxu0
        %1074 = vdwg.mxu0
        %v1075 = vpack.c.bf16 %v824, %v821
        %v1076 = vpack.c.bf16 %v832, %v829
        %v1077 = vpack.c.bf16 %v840, %v837
        %v1078 = vpack.c.bf16 %v848, %v845
        %v1079 = vpack.c.bf16 %v856, %v853
        %v1080 = vpack.c.bf16 %v864, %v861
        %v1081 = vpack.c.bf16 %v872, %v869
        %v1082 = vpack.c.bf16 %v880, %v877
        %v1083 = vpack.c.bf16 %v888, %v885
        %v1084 = vpack.c.bf16 %v896, %v893
        %v1085 = vpack.c.bf16 %v904, %v901
        %v1086 = vpack.c.bf16 %v912, %v909
        %v1087 = vpack.c.bf16 %v920, %v917
        %v1088 = vpack.c.bf16 %v928, %v925
        %v1089 = vpack.c.bf16 %v936, %v933
        %v1090 = vpack.c.bf16 %v944, %v941
        %v1091 = vpack.c.bf16 %v952, %v949
        %v1092 = vpack.c.bf16 %v960, %v957
        %v1093 = vpack.c.bf16 %v968, %v965
        %v1094 = vpack.c.bf16 %v976, %v973
        %v1095 = vpack.c.bf16 %v984, %v981
        %v1096 = vpack.c.bf16 %v992, %v989
        %v1097 = vpack.c.bf16 %v1000, %v997
        %v1098 = vpack.c.bf16 %v1008, %v1005
        %v1099 = vpack.c.bf16 %v1016, %v1013
        %v1100 = vpack.c.bf16 %v1024, %v1021
        %v1101 = vpack.c.bf16 %v1032, %v1029
        %v1102 = vpack.c.bf16 %v1040, %v1037
        %v1103 = vpack.c.bf16 %v1048, %v1045
        %v1104 = vpack.c.bf16 %v1056, %v1053
        %v1105 = vpack.c.bf16 %v1064, %v1061
        %v1106 = vpack.c.bf16 %v1072, %v1069
        %v1139 = vunpack.c.l.b16 %v1075
        %v1140 = vunpack.c.h.b16 %v1075
        %v1141 = vunpack.c.l.b16 %v1076
        %v1142 = vunpack.c.h.b16 %v1076
        %v1143 = vunpack.c.l.b16 %v1077
        %v1144 = vunpack.c.h.b16 %v1077
        %v1145 = vunpack.c.l.b16 %v1078
        %v1146 = vunpack.c.h.b16 %v1078
        %v1147 = vunpack.c.l.b16 %v1079
        %v1148 = vunpack.c.h.b16 %v1079
        %v1149 = vunpack.c.l.b16 %v1080
        %v1150 = vunpack.c.h.b16 %v1080
        %v1151 = vunpack.c.l.b16 %v1081
        %v1152 = vunpack.c.h.b16 %v1081
        %v1153 = vunpack.c.l.b16 %v1082
        %v1154 = vunpack.c.h.b16 %v1082
        %v1155 = vunpack.c.l.b16 %v1083
        %v1156 = vunpack.c.h.b16 %v1083
        %v1157 = vunpack.c.l.b16 %v1084
        %v1158 = vunpack.c.h.b16 %v1084
        %v1159 = vunpack.c.l.b16 %v1085
        %v1160 = vunpack.c.h.b16 %v1085
        %v1161 = vunpack.c.l.b16 %v1086
        %v1162 = vunpack.c.h.b16 %v1086
        %v1163 = vunpack.c.l.b16 %v1087
        %v1164 = vunpack.c.h.b16 %v1087
        %v1165 = vunpack.c.l.b16 %v1088
        %v1166 = vunpack.c.h.b16 %v1088
        %v1167 = vunpack.c.l.b16 %v1089
        %v1168 = vunpack.c.h.b16 %v1089
        %v1169 = vunpack.c.l.b16 %v1090
        %v1170 = vunpack.c.h.b16 %v1090
        %v1171 = vunpack.c.l.b16 %v1091
        %v1172 = vunpack.c.h.b16 %v1091
        %v1173 = vunpack.c.l.b16 %v1092
        %v1174 = vunpack.c.h.b16 %v1092
        %v1175 = vunpack.c.l.b16 %v1093
        %v1176 = vunpack.c.h.b16 %v1093
        %v1177 = vunpack.c.l.b16 %v1094
        %v1178 = vunpack.c.h.b16 %v1094
        %v1179 = vunpack.c.l.b16 %v1095
        %v1180 = vunpack.c.h.b16 %v1095
        %v1181 = vunpack.c.l.b16 %v1096
        %v1182 = vunpack.c.h.b16 %v1096
        %v1183 = vunpack.c.l.b16 %v1097
        %v1184 = vunpack.c.h.b16 %v1097
        %v1185 = vunpack.c.l.b16 %v1098
        %v1186 = vunpack.c.h.b16 %v1098
        %v1187 = vunpack.c.l.b16 %v1099
        %v1188 = vunpack.c.h.b16 %v1099
        %v1189 = vunpack.c.l.b16 %v1100
        %v1190 = vunpack.c.h.b16 %v1100
        %v1191 = vunpack.c.l.b16 %v1101
        %v1192 = vunpack.c.h.b16 %v1101
        %v1193 = vunpack.c.l.b16 %v1102
        %v1194 = vunpack.c.h.b16 %v1102
        %v1195 = vunpack.c.l.b16 %v1103
        %v1196 = vunpack.c.h.b16 %v1103
        %v1197 = vunpack.c.l.b16 %v1104
        %v1198 = vunpack.c.h.b16 %v1104
        %v1199 = vunpack.c.l.b16 %v1105
        %v1200 = vunpack.c.h.b16 %v1105
        %v1201 = vunpack.c.l.b16 %v1106
        %v1202 = vunpack.c.h.b16 %v1106
        %v1203 = vpack.c.b16 %v1139, %v1139
        %v1204 = vpack.c.b16 %v1140, %v1140
        %v1205 = vpack.c.b16 %v1141, %v1141
        %v1206 = vpack.c.b16 %v1142, %v1142
        %v1207 = vpack.c.b16 %v1143, %v1143
        %v1208 = vpack.c.b16 %v1144, %v1144
        %v1209 = vpack.c.b16 %v1145, %v1145
        %v1210 = vpack.c.b16 %v1146, %v1146
        %v1211 = vpack.c.b16 %v1147, %v1147
        %v1212 = vpack.c.b16 %v1148, %v1148
        %v1213 = vpack.c.b16 %v1149, %v1149
        %v1214 = vpack.c.b16 %v1150, %v1150
        %v1215 = vpack.c.b16 %v1151, %v1151
        %v1216 = vpack.c.b16 %v1152, %v1152
        %v1217 = vpack.c.b16 %v1153, %v1153
        %v1218 = vpack.c.b16 %v1154, %v1154
        %v1219 = vpack.c.b16 %v1155, %v1155
        %v1220 = vpack.c.b16 %v1156, %v1156
        %v1221 = vpack.c.b16 %v1157, %v1157
        %v1222 = vpack.c.b16 %v1158, %v1158
        %v1223 = vpack.c.b16 %v1159, %v1159
        %v1224 = vpack.c.b16 %v1160, %v1160
        %v1225 = vpack.c.b16 %v1161, %v1161
        %v1226 = vpack.c.b16 %v1162, %v1162
        %v1227 = vpack.c.b16 %v1163, %v1163
        %v1228 = vpack.c.b16 %v1164, %v1164
        %v1229 = vpack.c.b16 %v1165, %v1165
        %v1230 = vpack.c.b16 %v1166, %v1166
        %v1231 = vpack.c.b16 %v1167, %v1167
        %v1232 = vpack.c.b16 %v1168, %v1168
        %v1233 = vpack.c.b16 %v1169, %v1169
        %v1234 = vpack.c.b16 %v1170, %v1170
        %v1235 = vpack.c.b16 %v1171, %v1171
        %v1236 = vpack.c.b16 %v1172, %v1172
        %v1237 = vpack.c.b16 %v1173, %v1173
        %v1238 = vpack.c.b16 %v1174, %v1174
        %v1239 = vpack.c.b16 %v1175, %v1175
        %v1240 = vpack.c.b16 %v1176, %v1176
        %v1241 = vpack.c.b16 %v1177, %v1177
        %v1242 = vpack.c.b16 %v1178, %v1178
        %v1243 = vpack.c.b16 %v1179, %v1179
        %v1244 = vpack.c.b16 %v1180, %v1180
        %v1245 = vpack.c.b16 %v1181, %v1181
        %v1246 = vpack.c.b16 %v1182, %v1182
        %v1247 = vpack.c.b16 %v1183, %v1183
        %v1248 = vpack.c.b16 %v1184, %v1184
        %v1249 = vpack.c.b16 %v1185, %v1185
        %v1250 = vpack.c.b16 %v1186, %v1186
        %v1251 = vpack.c.b16 %v1187, %v1187
        %v1252 = vpack.c.b16 %v1188, %v1188
        %v1253 = vpack.c.b16 %v1189, %v1189
        %v1254 = vpack.c.b16 %v1190, %v1190
        %v1255 = vpack.c.b16 %v1191, %v1191
        %v1256 = vpack.c.b16 %v1192, %v1192
        %v1257 = vpack.c.b16 %v1193, %v1193
        %v1258 = vpack.c.b16 %v1194, %v1194
        %v1259 = vpack.c.b16 %v1195, %v1195
        %v1260 = vpack.c.b16 %v1196, %v1196
        %v1261 = vpack.c.b16 %v1197, %v1197
        %v1262 = vpack.c.b16 %v1198, %v1198
        %v1263 = vpack.c.b16 %v1199, %v1199
        %v1264 = vpack.c.b16 %v1200, %v1200
        %v1265 = vpack.c.b16 %v1201, %v1201
        %v1266 = vpack.c.b16 %v1202, %v1202
        %vm1331 = vcmask 519168
        %1332 = vst.msk [vmem:[%s228] sm:$0xf] %vm1331, %v1203
        %1333 = vst.msk [vmem:[%s228 + $0x4] sm:$0xf] %vm1331, %v1204
        %1334 = vst.msk [vmem:[%s228 + $0x8] sm:$0xf] %vm1331, %v1205
        %1335 = vst.msk [vmem:[%s228 + $0xc] sm:$0xf] %vm1331, %v1206
        %1336 = vst.msk [vmem:[%s228 + $0x10] sm:$0xf] %vm1331, %v1207
        %1337 = vst.msk [vmem:[%s228 + $0x14] sm:$0xf] %vm1331, %v1208
        %1338 = vst.msk [vmem:[%s228 + $0x18] sm:$0xf] %vm1331, %v1209
        %1339 = vst.msk [vmem:[%s228 + $0x1c] sm:$0xf] %vm1331, %v1210
        %1340 = vst.msk [vmem:[%s228 + $0x20] sm:$0xf] %vm1331, %v1211
        %1341 = vst.msk [vmem:[%s228 + $0x24] sm:$0xf] %vm1331, %v1212
        %1342 = vst.msk [vmem:[%s228 + $0x28] sm:$0xf] %vm1331, %v1213
        %1343 = vst.msk [vmem:[%s228 + $0x2c] sm:$0xf] %vm1331, %v1214
        %1344 = vst.msk [vmem:[%s228 + $0x30] sm:$0xf] %vm1331, %v1215
        %1345 = vst.msk [vmem:[%s228 + $0x34] sm:$0xf] %vm1331, %v1216
        %1346 = vst.msk [vmem:[%s228 + $0x38] sm:$0xf] %vm1331, %v1217
        %1347 = vst.msk [vmem:[%s228 + $0x3c] sm:$0xf] %vm1331, %v1218
        %1348 = vst.msk [vmem:[%s228 + $0x40] sm:$0xf] %vm1331, %v1219
        %1349 = vst.msk [vmem:[%s228 + $0x44] sm:$0xf] %vm1331, %v1220
        %1350 = vst.msk [vmem:[%s228 + $0x48] sm:$0xf] %vm1331, %v1221
        %1351 = vst.msk [vmem:[%s228 + $0x4c] sm:$0xf] %vm1331, %v1222
        %1352 = vst.msk [vmem:[%s228 + $0x50] sm:$0xf] %vm1331, %v1223
        %1353 = vst.msk [vmem:[%s228 + $0x54] sm:$0xf] %vm1331, %v1224
        %1354 = vst.msk [vmem:[%s228 + $0x58] sm:$0xf] %vm1331, %v1225
        %1355 = vst.msk [vmem:[%s228 + $0x5c] sm:$0xf] %vm1331, %v1226
        %1356 = vst.msk [vmem:[%s228 + $0x60] sm:$0xf] %vm1331, %v1227
        %1357 = vst.msk [vmem:[%s228 + $0x64] sm:$0xf] %vm1331, %v1228
        %1358 = vst.msk [vmem:[%s228 + $0x68] sm:$0xf] %vm1331, %v1229
        %1359 = vst.msk [vmem:[%s228 + $0x6c] sm:$0xf] %vm1331, %v1230
        %1360 = vst.msk [vmem:[%s228 + $0x70] sm:$0xf] %vm1331, %v1231
        %1361 = vst.msk [vmem:[%s228 + $0x74] sm:$0xf] %vm1331, %v1232
        %1362 = vst.msk [vmem:[%s228 + $0x78] sm:$0xf] %vm1331, %v1233
        %1363 = vst.msk [vmem:[%s228 + $0x7c] sm:$0xf] %vm1331, %v1234
        %1364 = vst.msk [vmem:[%s228 + $0x80] sm:$0xf] %vm1331, %v1235
        %1365 = vst.msk [vmem:[%s228 + $0x84] sm:$0xf] %vm1331, %v1236
        %1366 = vst.msk [vmem:[%s228 + $0x88] sm:$0xf] %vm1331, %v1237
        %1367 = vst.msk [vmem:[%s228 + $0x8c] sm:$0xf] %vm1331, %v1238
        %1368 = vst.msk [vmem:[%s228 + $0x90] sm:$0xf] %vm1331, %v1239
        %1369 = vst.msk [vmem:[%s228 + $0x94] sm:$0xf] %vm1331, %v1240
        %1370 = vst.msk [vmem:[%s228 + $0x98] sm:$0xf] %vm1331, %v1241
        %1371 = vst.msk [vmem:[%s228 + $0x9c] sm:$0xf] %vm1331, %v1242
        %1372 = vst.msk [vmem:[%s228 + $0xa0] sm:$0xf] %vm1331, %v1243
        %1373 = vst.msk [vmem:[%s228 + $0xa4] sm:$0xf] %vm1331, %v1244
        %1374 = vst.msk [vmem:[%s228 + $0xa8] sm:$0xf] %vm1331, %v1245
        %1375 = vst.msk [vmem:[%s228 + $0xac] sm:$0xf] %vm1331, %v1246
        %1376 = vst.msk [vmem:[%s228 + $0xb0] sm:$0xf] %vm1331, %v1247
        %1377 = vst.msk [vmem:[%s228 + $0xb4] sm:$0xf] %vm1331, %v1248
        %1378 = vst.msk [vmem:[%s228 + $0xb8] sm:$0xf] %vm1331, %v1249
        %1379 = vst.msk [vmem:[%s228 + $0xbc] sm:$0xf] %vm1331, %v1250
        %1380 = vst.msk [vmem:[%s228 + $0xc0] sm:$0xf] %vm1331, %v1251
        %1381 = vst.msk [vmem:[%s228 + $0xc4] sm:$0xf] %vm1331, %v1252
        %1382 = vst.msk [vmem:[%s228 + $0xc8] sm:$0xf] %vm1331, %v1253
        %1383 = vst.msk [vmem:[%s228 + $0xcc] sm:$0xf] %vm1331, %v1254
        %1384 = vst.msk [vmem:[%s228 + $0xd0] sm:$0xf] %vm1331, %v1255
        %1385 = vst.msk [vmem:[%s228 + $0xd4] sm:$0xf] %vm1331, %v1256
        %1386 = vst.msk [vmem:[%s228 + $0xd8] sm:$0xf] %vm1331, %v1257
        %1387 = vst.msk [vmem:[%s228 + $0xdc] sm:$0xf] %vm1331, %v1258
        %1388 = vst.msk [vmem:[%s228 + $0xe0] sm:$0xf] %vm1331, %v1259
        %1389 = vst.msk [vmem:[%s228 + $0xe4] sm:$0xf] %vm1331, %v1260
        %1390 = vst.msk [vmem:[%s228 + $0xe8] sm:$0xf] %vm1331, %v1261
        %1391 = vst.msk [vmem:[%s228 + $0xec] sm:$0xf] %vm1331, %v1262
        %1392 = vst.msk [vmem:[%s228 + $0xf0] sm:$0xf] %vm1331, %v1263
        %1393 = vst.msk [vmem:[%s228 + $0xf4] sm:$0xf] %vm1331, %v1264
        %1394 = vst.msk [vmem:[%s228 + $0xf8] sm:$0xf] %vm1331, %v1265
        %1395 = vst.msk [vmem:[%s228 + $0xfc] sm:$0xf] %vm1331, %v1266
        %vm1396 = vcmask 523264
        %v1397 = vsel %vm1396, %v821, 0.0
        %v1398 = vsel %vm1396, %v824, 0.0
        %v1399 = vadd.f32 %v1397, %v1398
        %v1400 = vsel %vm1396, %v829, 0.0
        %v1401 = vadd.f32 %v1399, %v1400
        %v1402 = vsel %vm1396, %v832, 0.0
        %v1403 = vadd.f32 %v1401, %v1402
        %v1404 = vsel %vm1396, %v837, 0.0
        %v1405 = vadd.f32 %v1403, %v1404
        %v1406 = vsel %vm1396, %v840, 0.0
        %v1407 = vadd.f32 %v1405, %v1406
        %v1408 = vsel %vm1396, %v845, 0.0
        %v1409 = vadd.f32 %v1407, %v1408
        %v1410 = vsel %vm1396, %v848, 0.0
        %v1411 = vadd.f32 %v1409, %v1410
        %v1412 = vsel %vm1396, %v853, 0.0
        %v1413 = vadd.f32 %v1411, %v1412
        %v1414 = vsel %vm1396, %v856, 0.0
        %v1415 = vadd.f32 %v1413, %v1414
        %v1416 = vsel %vm1396, %v861, 0.0
        %v1417 = vadd.f32 %v1415, %v1416
        %v1418 = vsel %vm1396, %v864, 0.0
        %v1419 = vadd.f32 %v1417, %v1418
        %v1420 = vsel %vm1396, %v869, 0.0
        %v1421 = vadd.f32 %v1419, %v1420
        %v1422 = vsel %vm1396, %v872, 0.0
        %v1423 = vadd.f32 %v1421, %v1422
        %v1424 = vsel %vm1396, %v877, 0.0
        %v1425 = vadd.f32 %v1423, %v1424
        %v1426 = vsel %vm1396, %v880, 0.0
        %v1427 = vadd.f32 %v1425, %v1426
        %v1428 = vsel %vm1396, %v885, 0.0
        %v1429 = vadd.f32 %v1427, %v1428
        %v1430 = vsel %vm1396, %v888, 0.0
        %v1431 = vadd.f32 %v1429, %v1430
        %v1432 = vsel %vm1396, %v893, 0.0
        %v1433 = vadd.f32 %v1431, %v1432
        %v1434 = vsel %vm1396, %v896, 0.0
        %v1435 = vadd.f32 %v1433, %v1434
        %v1436 = vsel %vm1396, %v901, 0.0
        %v1437 = vadd.f32 %v1435, %v1436
        %v1438 = vsel %vm1396, %v904, 0.0
        %v1439 = vadd.f32 %v1437, %v1438
        %v1440 = vsel %vm1396, %v909, 0.0
        %v1441 = vadd.f32 %v1439, %v1440
        %v1442 = vsel %vm1396, %v912, 0.0
        %v1443 = vadd.f32 %v1441, %v1442
        %v1444 = vsel %vm1396, %v917, 0.0
        %v1445 = vadd.f32 %v1443, %v1444
        %v1446 = vsel %vm1396, %v920, 0.0
        %v1447 = vadd.f32 %v1445, %v1446
        %v1448 = vsel %vm1396, %v925, 0.0
        %v1449 = vadd.f32 %v1447, %v1448
        %v1450 = vsel %vm1396, %v928, 0.0
        %v1451 = vadd.f32 %v1449, %v1450
        %v1452 = vsel %vm1396, %v933, 0.0
        %v1453 = vadd.f32 %v1451, %v1452
        %v1454 = vsel %vm1396, %v936, 0.0
        %v1455 = vadd.f32 %v1453, %v1454
        %v1456 = vsel %vm1396, %v941, 0.0
        %v1457 = vadd.f32 %v1455, %v1456
        %v1458 = vsel %vm1396, %v944, 0.0
        %v1459 = vadd.f32 %v1457, %v1458
        %v1460 = vsel %vm1396, %v949, 0.0
        %v1461 = vadd.f32 %v1459, %v1460
        %v1462 = vsel %vm1396, %v952, 0.0
        %v1463 = vadd.f32 %v1461, %v1462
        %v1464 = vsel %vm1396, %v957, 0.0
        %v1465 = vadd.f32 %v1463, %v1464
        %v1466 = vsel %vm1396, %v960, 0.0
        %v1467 = vadd.f32 %v1465, %v1466
        %v1468 = vsel %vm1396, %v965, 0.0
        %v1469 = vadd.f32 %v1467, %v1468
        %v1470 = vsel %vm1396, %v968, 0.0
        %v1471 = vadd.f32 %v1469, %v1470
        %v1472 = vsel %vm1396, %v973, 0.0
        %v1473 = vadd.f32 %v1471, %v1472
        %v1474 = vsel %vm1396, %v976, 0.0
        %v1475 = vadd.f32 %v1473, %v1474
        %v1476 = vsel %vm1396, %v981, 0.0
        %v1477 = vadd.f32 %v1475, %v1476
        %v1478 = vsel %vm1396, %v984, 0.0
        %v1479 = vadd.f32 %v1477, %v1478
        %v1480 = vsel %vm1396, %v989, 0.0
        %v1481 = vadd.f32 %v1479, %v1480
        %v1482 = vsel %vm1396, %v992, 0.0
        %v1483 = vadd.f32 %v1481, %v1482
        %v1484 = vsel %vm1396, %v997, 0.0
        %v1485 = vadd.f32 %v1483, %v1484
        %v1486 = vsel %vm1396, %v1000, 0.0
        %v1487 = vadd.f32 %v1485, %v1486
        %v1488 = vsel %vm1396, %v1005, 0.0
        %v1489 = vadd.f32 %v1487, %v1488
        %v1490 = vsel %vm1396, %v1008, 0.0
        %v1491 = vadd.f32 %v1489, %v1490
        %v1492 = vsel %vm1396, %v1013, 0.0
        %v1493 = vadd.f32 %v1491, %v1492
        %v1494 = vsel %vm1396, %v1016, 0.0
        %v1495 = vadd.f32 %v1493, %v1494
        %v1496 = vsel %vm1396, %v1021, 0.0
        %v1497 = vadd.f32 %v1495, %v1496
        %v1498 = vsel %vm1396, %v1024, 0.0
        %v1499 = vadd.f32 %v1497, %v1498
        %v1500 = vsel %vm1396, %v1029, 0.0
        %v1501 = vadd.f32 %v1499, %v1500
        %v1502 = vsel %vm1396, %v1032, 0.0
        %v1503 = vadd.f32 %v1501, %v1502
        %v1504 = vsel %vm1396, %v1037, 0.0
        %v1505 = vadd.f32 %v1503, %v1504
        %v1506 = vsel %vm1396, %v1040, 0.0
        %v1507 = vadd.f32 %v1505, %v1506
        %v1508 = vsel %vm1396, %v1045, 0.0
        %v1509 = vadd.f32 %v1507, %v1508
        %v1510 = vsel %vm1396, %v1048, 0.0
        %v1511 = vadd.f32 %v1509, %v1510
        %v1512 = vsel %vm1396, %v1053, 0.0
        %v1513 = vadd.f32 %v1511, %v1512
        %v1514 = vsel %vm1396, %v1056, 0.0
        %v1515 = vadd.f32 %v1513, %v1514
        %v1516 = vsel %vm1396, %v1061, 0.0
        %v1517 = vadd.f32 %v1515, %v1516
        %v1518 = vsel %vm1396, %v1064, 0.0
        %v1519 = vadd.f32 %v1517, %v1518
        %v1520 = vsel %vm1396, %v1069, 0.0
        %v1521 = vadd.f32 %v1519, %v1520
        %v1522 = vsel %vm1396, %v1072, 0.0
        %v1523 = vadd.f32 %v1521, %v1522
        %v1524 = vrot.slane %v1523, 4
        %v1525 = vadd.f32 %v1523, %v1524
        %v1526 = vrot.slane %v1525, 2
        %v1527 = vadd.f32 %v1525, %v1526
        %v1528 = vrot.slane %v1527, 1
        %v1529 = vadd.f32 %v1527, %v1528
        %vm1530 = vcmask 516096
        %1531 = vst.msk [vmem:[%s234] sm:$0x1] %vm1530, %v1529
        %v1532 = vmul.f32 %v821, %v821
        %v1533 = vmul.f32 %v824, %v824
        %v1534 = vmul.f32 %v829, %v829
        %v1535 = vmul.f32 %v832, %v832
        %v1536 = vmul.f32 %v837, %v837
        %v1537 = vmul.f32 %v840, %v840
        %v1538 = vmul.f32 %v845, %v845
        %v1539 = vmul.f32 %v848, %v848
        %v1540 = vmul.f32 %v853, %v853
        %v1541 = vmul.f32 %v856, %v856
        %v1542 = vmul.f32 %v861, %v861
        %v1543 = vmul.f32 %v864, %v864
        %v1544 = vmul.f32 %v869, %v869
        %v1545 = vmul.f32 %v872, %v872
        %v1546 = vmul.f32 %v877, %v877
        %v1547 = vmul.f32 %v880, %v880
        %v1548 = vmul.f32 %v885, %v885
        %v1549 = vmul.f32 %v888, %v888
        %v1550 = vmul.f32 %v893, %v893
        %v1551 = vmul.f32 %v896, %v896
        %v1552 = vmul.f32 %v901, %v901
        %v1553 = vmul.f32 %v904, %v904
        %v1554 = vmul.f32 %v909, %v909
        %v1555 = vmul.f32 %v912, %v912
        %v1556 = vmul.f32 %v917, %v917
        %v1557 = vmul.f32 %v920, %v920
        %v1558 = vmul.f32 %v925, %v925
        %v1559 = vmul.f32 %v928, %v928
        %v1560 = vmul.f32 %v933, %v933
        %v1561 = vmul.f32 %v936, %v936
        %v1562 = vmul.f32 %v941, %v941
        %v1563 = vmul.f32 %v944, %v944
        %v1564 = vmul.f32 %v949, %v949
        %v1565 = vmul.f32 %v952, %v952
        %v1566 = vmul.f32 %v957, %v957
        %v1567 = vmul.f32 %v960, %v960
        %v1568 = vmul.f32 %v965, %v965
        %v1569 = vmul.f32 %v968, %v968
        %v1570 = vmul.f32 %v973, %v973
        %v1571 = vmul.f32 %v976, %v976
        %v1572 = vmul.f32 %v981, %v981
        %v1573 = vmul.f32 %v984, %v984
        %v1574 = vmul.f32 %v989, %v989
        %v1575 = vmul.f32 %v992, %v992
        %v1576 = vmul.f32 %v997, %v997
        %v1577 = vmul.f32 %v1000, %v1000
        %v1578 = vmul.f32 %v1005, %v1005
        %v1579 = vmul.f32 %v1008, %v1008
        %v1580 = vmul.f32 %v1013, %v1013
        %v1581 = vmul.f32 %v1016, %v1016
        %v1582 = vmul.f32 %v1021, %v1021
        %v1583 = vmul.f32 %v1024, %v1024
        %v1584 = vmul.f32 %v1029, %v1029
        %v1585 = vmul.f32 %v1032, %v1032
        %v1586 = vmul.f32 %v1037, %v1037
        %v1587 = vmul.f32 %v1040, %v1040
        %v1588 = vmul.f32 %v1045, %v1045
        %v1589 = vmul.f32 %v1048, %v1048
        %v1590 = vmul.f32 %v1053, %v1053
        %v1591 = vmul.f32 %v1056, %v1056
        %v1592 = vmul.f32 %v1061, %v1061
        %v1593 = vmul.f32 %v1064, %v1064
        %v1594 = vmul.f32 %v1069, %v1069
        %v1595 = vmul.f32 %v1072, %v1072
        %v1596 = vsel %vm1396, %v1532, 0.0
        %v1597 = vsel %vm1396, %v1533, 0.0
        %v1598 = vadd.f32 %v1596, %v1597
        %v1599 = vsel %vm1396, %v1534, 0.0
        %v1600 = vadd.f32 %v1598, %v1599
        %v1601 = vsel %vm1396, %v1535, 0.0
        %v1602 = vadd.f32 %v1600, %v1601
        %v1603 = vsel %vm1396, %v1536, 0.0
        %v1604 = vadd.f32 %v1602, %v1603
        %v1605 = vsel %vm1396, %v1537, 0.0
        %v1606 = vadd.f32 %v1604, %v1605
        %v1607 = vsel %vm1396, %v1538, 0.0
        %v1608 = vadd.f32 %v1606, %v1607
        %v1609 = vsel %vm1396, %v1539, 0.0
        %v1610 = vadd.f32 %v1608, %v1609
        %v1611 = vsel %vm1396, %v1540, 0.0
        %v1612 = vadd.f32 %v1610, %v1611
        %v1613 = vsel %vm1396, %v1541, 0.0
        %v1614 = vadd.f32 %v1612, %v1613
        %v1615 = vsel %vm1396, %v1542, 0.0
        %v1616 = vadd.f32 %v1614, %v1615
        %v1617 = vsel %vm1396, %v1543, 0.0
        %v1618 = vadd.f32 %v1616, %v1617
        %v1619 = vsel %vm1396, %v1544, 0.0
        %v1620 = vadd.f32 %v1618, %v1619
        %v1621 = vsel %vm1396, %v1545, 0.0
        %v1622 = vadd.f32 %v1620, %v1621
        %v1623 = vsel %vm1396, %v1546, 0.0
        %v1624 = vadd.f32 %v1622, %v1623
        %v1625 = vsel %vm1396, %v1547, 0.0
        %v1626 = vadd.f32 %v1624, %v1625
        %v1627 = vsel %vm1396, %v1548, 0.0
        %v1628 = vadd.f32 %v1626, %v1627
        %v1629 = vsel %vm1396, %v1549, 0.0
        %v1630 = vadd.f32 %v1628, %v1629
        %v1631 = vsel %vm1396, %v1550, 0.0
        %v1632 = vadd.f32 %v1630, %v1631
        %v1633 = vsel %vm1396, %v1551, 0.0
        %v1634 = vadd.f32 %v1632, %v1633
        %v1635 = vsel %vm1396, %v1552, 0.0
        %v1636 = vadd.f32 %v1634, %v1635
        %v1637 = vsel %vm1396, %v1553, 0.0
        %v1638 = vadd.f32 %v1636, %v1637
        %v1639 = vsel %vm1396, %v1554, 0.0
        %v1640 = vadd.f32 %v1638, %v1639
        %v1641 = vsel %vm1396, %v1555, 0.0
        %v1642 = vadd.f32 %v1640, %v1641
        %v1643 = vsel %vm1396, %v1556, 0.0
        %v1644 = vadd.f32 %v1642, %v1643
        %v1645 = vsel %vm1396, %v1557, 0.0
        %v1646 = vadd.f32 %v1644, %v1645
        %v1647 = vsel %vm1396, %v1558, 0.0
        %v1648 = vadd.f32 %v1646, %v1647
        %v1649 = vsel %vm1396, %v1559, 0.0
        %v1650 = vadd.f32 %v1648, %v1649
        %v1651 = vsel %vm1396, %v1560, 0.0
        %v1652 = vadd.f32 %v1650, %v1651
        %v1653 = vsel %vm1396, %v1561, 0.0
        %v1654 = vadd.f32 %v1652, %v1653
        %v1655 = vsel %vm1396, %v1562, 0.0
        %v1656 = vadd.f32 %v1654, %v1655
        %v1657 = vsel %vm1396, %v1563, 0.0
        %v1658 = vadd.f32 %v1656, %v1657
        %v1659 = vsel %vm1396, %v1564, 0.0
        %v1660 = vadd.f32 %v1658, %v1659
        %v1661 = vsel %vm1396, %v1565, 0.0
        %v1662 = vadd.f32 %v1660, %v1661
        %v1663 = vsel %vm1396, %v1566, 0.0
        %v1664 = vadd.f32 %v1662, %v1663
        %v1665 = vsel %vm1396, %v1567, 0.0
        %v1666 = vadd.f32 %v1664, %v1665
        %v1667 = vsel %vm1396, %v1568, 0.0
        %v1668 = vadd.f32 %v1666, %v1667
        %v1669 = vsel %vm1396, %v1569, 0.0
        %v1670 = vadd.f32 %v1668, %v1669
        %v1671 = vsel %vm1396, %v1570, 0.0
        %v1672 = vadd.f32 %v1670, %v1671
        %v1673 = vsel %vm1396, %v1571, 0.0
        %v1674 = vadd.f32 %v1672, %v1673
        %v1675 = vsel %vm1396, %v1572, 0.0
        %v1676 = vadd.f32 %v1674, %v1675
        %v1677 = vsel %vm1396, %v1573, 0.0
        %v1678 = vadd.f32 %v1676, %v1677
        %v1679 = vsel %vm1396, %v1574, 0.0
        %v1680 = vadd.f32 %v1678, %v1679
        %v1681 = vsel %vm1396, %v1575, 0.0
        %v1682 = vadd.f32 %v1680, %v1681
        %v1683 = vsel %vm1396, %v1576, 0.0
        %v1684 = vadd.f32 %v1682, %v1683
        %v1685 = vsel %vm1396, %v1577, 0.0
        %v1686 = vadd.f32 %v1684, %v1685
        %v1687 = vsel %vm1396, %v1578, 0.0
        %v1688 = vadd.f32 %v1686, %v1687
        %v1689 = vsel %vm1396, %v1579, 0.0
        %v1690 = vadd.f32 %v1688, %v1689
        %v1691 = vsel %vm1396, %v1580, 0.0
        %v1692 = vadd.f32 %v1690, %v1691
        %v1693 = vsel %vm1396, %v1581, 0.0
        %v1694 = vadd.f32 %v1692, %v1693
        %v1695 = vsel %vm1396, %v1582, 0.0
        %v1696 = vadd.f32 %v1694, %v1695
        %v1697 = vsel %vm1396, %v1583, 0.0
        %v1698 = vadd.f32 %v1696, %v1697
        %v1699 = vsel %vm1396, %v1584, 0.0
        %v1700 = vadd.f32 %v1698, %v1699
        %v1701 = vsel %vm1396, %v1585, 0.0
        %v1702 = vadd.f32 %v1700, %v1701
        %v1703 = vsel %vm1396, %v1586, 0.0
        %v1704 = vadd.f32 %v1702, %v1703
        %v1705 = vsel %vm1396, %v1587, 0.0
        %v1706 = vadd.f32 %v1704, %v1705
        %v1707 = vsel %vm1396, %v1588, 0.0
        %v1708 = vadd.f32 %v1706, %v1707
        %v1709 = vsel %vm1396, %v1589, 0.0
        %v1710 = vadd.f32 %v1708, %v1709
        %v1711 = vsel %vm1396, %v1590, 0.0
        %v1712 = vadd.f32 %v1710, %v1711
        %v1713 = vsel %vm1396, %v1591, 0.0
        %v1714 = vadd.f32 %v1712, %v1713
        %v1715 = vsel %vm1396, %v1592, 0.0
        %v1716 = vadd.f32 %v1714, %v1715
        %v1717 = vsel %vm1396, %v1593, 0.0
        %v1718 = vadd.f32 %v1716, %v1717
        %v1719 = vsel %vm1396, %v1594, 0.0
        %v1720 = vadd.f32 %v1718, %v1719
        %v1721 = vsel %vm1396, %v1595, 0.0
        %v1722 = vadd.f32 %v1720, %v1721
        %v1723 = vrot.slane %v1722, 4
        %v1724 = vadd.f32 %v1722, %v1723
        %v1725 = vrot.slane %v1724, 2
        %v1726 = vadd.f32 %v1724, %v1725
        %v1727 = vrot.slane %v1726, 1
        %v1728 = vadd.f32 %v1726, %v1727
        %1729 = vst.msk [vmem:[%s240] sm:$0x1] %vm1530, %v1728
        %s1730 = sand.u32 %s96, 1
        %s1731 = scalar_lea.sflag [#allocation3], %s1730
        %s1732 = sand.u32 %s96, 1
        %s1733 = smul.addr %s1732, 256
        %s1734 = scalar_lea.vmem [#allocation2], %s1733
        %s1735 = sand.u32 %s22, 1
        %s1736 = scalar_lea.sflag [#allocation5], %s1735
        %s1737 = sand.u32 %s124, 1
        %s1738 = scalar_lea.vmem [#allocation4], %s1737
        %s1739 = sand.u32 %s22, 1
        %s1740 = scalar_lea.sflag [#allocation5], %s1739
        %s1741 = sand.u32 %s152, 1
        %s1742 = scalar_lea.vmem [#allocation6], %s1741
        // Predicated region
        $region29: #{tpu_custom_call.1} parent=27 // pred_check
          %p1743 = pneg %p106
        $region30: #{tpu_custom_call.1} parent=27 // pred_check_branch
          %1745 = sbr.rel (%p1743) target = $region32
        $region31: #{tpu_custom_call.1} parent=27 // pred_region
          %s1746 = smul.u32 64, %s26
          %s1748 = ssub.s32 4096, 4096
          %1749 = vsyncadd %s1731, %s1748
          %s1750 = sadd.s32 %s27, %s1746
          %s1751 = smul.addr %s1750, 64
          %s1752 = scalar_lea.hbm %s2, %s1751
          %s1753 = sshll.u32 %s1734, 4
          %s1754 = int_to_ptr.vmem [resolvable:$true] %s1753
          %1759 = dma.vmem_to_hbm [thread:$0]  %s1754, 4096, %s1752, %s1731, 64, 64, 4
        $region32: #{tpu_custom_call.1} parent=27 // pred_fallthru
          _
        // Predicated region
        $region33: #{tpu_custom_call.1} parent=27 // pred_check
          %p1760 = pneg %p134
        $region34: #{tpu_custom_call.1} parent=27 // pred_check_branch
          %1762 = sbr.rel (%p1760) target = $region36
        $region35: #{tpu_custom_call.1} parent=27 // pred_region
          %s1764 = ssub.s32 16, 16
          %1765 = vsyncadd %s1736, %s1764
          %s1766 = sadd.s32 %s27, %s26
          %s1767 = smul.addr %s1766, 16
          %s1768 = scalar_lea.hbm %s3, %s1767
          %s1770 = sshll.u32 %s1738, 4
          %s1771 = int_to_ptr.vmem [resolvable:$true] %s1770
          %1773 = dma.vmem_to_hbm [thread:$0]  %s1771, 16, %s1768, %s1736
        $region36: #{tpu_custom_call.1} parent=27 // pred_fallthru
          _
        // Predicated region
        $region37: #{tpu_custom_call.1} parent=27 // pred_check
          %p1774 = pneg %p162
        $region38: #{tpu_custom_call.1} parent=27 // pred_check_branch
          %1776 = sbr.rel (%p1774) target = $region40
        $region39: #{tpu_custom_call.1} parent=27 // pred_region
          %s1778 = ssub.s32 16, 16
          %1779 = vsyncadd %s1740, %s1778
          %s1780 = sadd.s32 %s27, %s26
          %s1781 = smul.addr %s1780, 16
          %s1782 = scalar_lea.hbm %s4, %s1781
          %s1784 = sshll.u32 %s1742, 4
          %s1785 = int_to_ptr.vmem [resolvable:$true] %s1784
          %1787 = dma.vmem_to_hbm [thread:$0]  %s1785, 16, %s1782, %s1740
        $region40: #{tpu_custom_call.1} parent=27 // pred_fallthru
          _
      $region28: #{tpu_custom_call.1} parent=5 // pred_fallthru
        _
      %p1788 = scmp.le.s32.totalorder 2, %s17
      // Predicated region
      $region41: #{tpu_custom_call.1} parent=5 // pred_check
        %p1789 = pneg %p1788
      $region42: #{tpu_custom_call.1} parent=5 // pred_check_branch
        %1791 = sbr.rel (%p1789) target = $region44
      $region43: #{tpu_custom_call.1} parent=5 // pred_region
        %s1792 = ssub.s32 %s17, 2
        // Predicated region
        $region45: #{tpu_custom_call.1} parent=43 // pred_check
          %p1793 = pneg %p112
        $region46: #{tpu_custom_call.1} parent=43 // pred_check_branch
          %1795 = sbr.rel (%p1793) target = $region48
        $region47: #{tpu_custom_call.1} parent=43 // pred_region
          %s1796 = sand.u32 %s97, 1
          %s1797 = scalar_lea.sflag [#allocation3], %s1796
          %s1798 = sand.u32 %s97, 1
          %s1799 = smul.addr %s1798, 256
          %s1800 = scalar_lea.vmem [#allocation2], %s1799
          %1801 = dma.done %s1797, 4096
        $region48: #{tpu_custom_call.1} parent=43 // pred_fallthru
          _
        // Predicated region
        $region49: #{tpu_custom_call.1} parent=43 // pred_check
          %p1802 = pneg %p140
        $region50: #{tpu_custom_call.1} parent=43 // pred_check_branch
          %1804 = sbr.rel (%p1802) target = $region52
        $region51: #{tpu_custom_call.1} parent=43 // pred_region
          %s1805 = sand.u32 %s23, 1
          %s1806 = scalar_lea.sflag [#allocation5], %s1805
          %s1807 = sand.u32 %s125, 1
          %s1808 = scalar_lea.vmem [#allocation4], %s1807
          %1809 = dma.done %s1806, 16
        $region52: #{tpu_custom_call.1} parent=43 // pred_fallthru
          _
        // Predicated region
        $region53: #{tpu_custom_call.1} parent=43 // pred_check
          %p1810 = pneg %p168
        $region54: #{tpu_custom_call.1} parent=43 // pred_check_branch
          %1812 = sbr.rel (%p1810) target = $region56
        $region55: #{tpu_custom_call.1} parent=43 // pred_region
          %s1813 = sand.u32 %s23, 1
          %s1814 = scalar_lea.sflag [#allocation5], %s1813
          %s1815 = sand.u32 %s153, 1
          %s1816 = scalar_lea.vmem [#allocation6], %s1815
          %1817 = dma.done %s1814, 16
        $region56: #{tpu_custom_call.1} parent=43 // pred_fallthru
          _
      $region44: #{tpu_custom_call.1} parent=5 // pred_fallthru
        _
    $region6: #{tpu_custom_call.1} parent=1 // loop_footer
      %s21 = sadd.s32 1, %s17
    $region7: #{tpu_custom_call.1} parent=1 // loop_footer_branch
      %16 = sbr.rel target = $region3
    $region8: #{tpu_custom_call.1} parent=1 // loop_exit
      _
    %1818 = vsyncpa [#allocation3], 1
    %s1819 = scalar_lea.sflag [#allocation3], 1
    %1820 = vsyncpa %s1819, 1
    %1821 = vsyncpa [#allocation5], 1
    %s1822 = scalar_lea.sflag [#allocation5], 1
    %1823 = vsyncpa %s1822, 1

</llo_original>
